<compile_context>
chip_gen: v7x
topology: tpu7x:2x2x1
jax: 0.10.0
libtpu: 0.0.40
codegen_flags: <defaults>
</compile_context>

<pallas_src>
import functools

import jax
import jax.numpy as jnp
from jax import lax
from jax.experimental import pallas as pl
from jax.experimental.pallas import tpu as pltpu


def _layer_norm(z, g, b, eps=1e-5):
    mu = jnp.mean(z, axis=-1, keepdims=True)
    var = jnp.mean(jnp.square(z - mu), axis=-1, keepdims=True)
    return (z - mu) * lax.rsqrt(var + eps) * g + b


def _split_heads(t, nhead):
    # (n, D) -> (nhead, n, dh); last (lane) dim stays in place.
    n, d = t.shape
    return jnp.transpose(t.reshape(n, nhead, d // nhead), (1, 0, 2))


def _merge_heads(t):
    # (nhead, n, dh) -> (n, nhead * dh)
    h, n, f = t.shape
    return jnp.transpose(t, (1, 0, 2)).reshape(n, h * f)


# --------------------------------------------------------------------------
# Pre-pass: K / V projection (+ head split), one batch element per grid step.
# --------------------------------------------------------------------------
def kv_proj_kernel(x_ref, wk_ref, wv_ref, bk_ref, bv_ref, k_ref, v_ref, *, nhead):
    cd = x_ref.dtype
    x = x_ref[0]                                                        # (S, D)
    k = jnp.dot(x, wk_ref[...], preferred_element_type=jnp.float32) + bk_ref[...]
    v = jnp.dot(x, wv_ref[...], preferred_element_type=jnp.float32) + bv_ref[...]
    # cast to bf16 BEFORE the head-split relayout (halves relayout traffic)
    k_ref[0] = _split_heads(k.astype(cd), nhead)                        # (H, S, dh)
    v_ref[0] = _split_heads(v.astype(cd), nhead)                        # (H, S, dh)


# --------------------------------------------------------------------------
# Main kernel: one (batch, query-tile) per grid step.
# --------------------------------------------------------------------------
def transformer_layer_kernel(x_ref, k_ref, v_ref,
                             wq_ref, bq_ref, wo_ref, bo_ref,
                             g1_ref, beta1_ref,
                             w1_ref, b1_ref, w2_ref, b2_ref,
                             g2_ref, beta2_ref,
                             o_ref,
                             *, nhead, kv_tile, dff_tile):
    cd = x_ref.dtype                   # matmul-operand dtype (bf16)
    f32 = jnp.float32
    tq, D = x_ref.shape[1], x_ref.shape[2]
    S = v_ref.shape[2]
    dh = D // nhead

    # ---- query projection (1/sqrt(dh) already folded into Wq / bq) ----
    xq = x_ref[0]                                                       # (tq, D) bf16
    q = jnp.dot(xq, wq_ref[...], preferred_element_type=f32) + bq_ref[...]
    qh = _split_heads(q.astype(cd), nhead)                              # (H, tq, dh)

    # ---- attention: flash-style online softmax over KV tiles ----
    nkv = S // kv_tile
    if nkv == 1:
        s = jnp.einsum("hqf,hkf->hqk", qh, k_ref[0],
                       preferred_element_type=f32)                      # (H, tq, S)
        s = s - jnp.max(s, axis=-1, keepdims=True)
        p = jnp.exp(s)
        l = jnp.sum(p, axis=-1, keepdims=True)
        acc = jnp.einsum("hqk,hkf->hqf", p.astype(cd), v_ref[0],
                         preferred_element_type=f32)                    # (H, tq, dh)
    else:
        def kv_body(i, carry):
            m, l, acc = carry
            k0 = pl.multiple_of(i * kv_tile, kv_tile)
            kt = k_ref[0, :, pl.ds(k0, kv_tile), :]                     # (H, tkv, dh)
            vt = v_ref[0, :, pl.ds(k0, kv_tile), :]                     # (H, tkv, dh)
            s = jnp.einsum("hqf,hkf->hqk", qh, kt,
                           preferred_element_type=f32)                  # (H, tq, tkv)
            m_new = jnp.maximum(m, jnp.max(s, axis=-1, keepdims=True))
            alpha = jnp.exp(m - m_new)
            p = jnp.exp(s - m_new)
            l_new = alpha * l + jnp.sum(p, axis=-1, keepdims=True)
            acc_new = alpha * acc + jnp.einsum(
                "hqk,hkf->hqf", p.astype(cd), vt, preferred_element_type=f32)
            return m_new, l_new, acc_new

        m0 = jnp.full((nhead, tq, 1), -jnp.inf, f32)
        l0 = jnp.zeros((nhead, tq, 1), f32)
        a0 = jnp.zeros((nhead, tq, dh), f32)
        _, l, acc = lax.fori_loop(0, nkv, kv_body, (m0, l0, a0))

    inv = pl.reciprocal(l, approx=True)                                 # EUP slot
    oh = (acc * inv).astype(cd)                                         # bf16 before merge
    attn = jnp.dot(_merge_heads(oh), wo_ref[...],
                   preferred_element_type=f32) + bo_ref[...]            # (tq, D)

    # ---- residual + LayerNorm 1 (f32) ----
    x1 = _layer_norm(xq.astype(f32) + attn, g1_ref[...], beta1_ref[...])
    x1c = x1.astype(cd)

    # ---- feed-forward, tiled over Dff with f32 accumulator ----
    dff = w1_ref.shape[1]
    n_dff = dff // dff_tile
    if n_dff == 1:
        h1 = jnp.maximum(jnp.dot(x1c, w1_ref[...], preferred_element_type=f32)
                         + b1_ref[...], 0.0).astype(cd)
        ff = jnp.dot(h1, w2_ref[...], preferred_element_type=f32)
    else:
        def ffn_body(c, acc_ff):
            c0 = pl.multiple_of(c * dff_tile, dff_tile)
            h1 = jnp.dot(x1c, w1_ref[:, pl.ds(c0, dff_tile)],
                         preferred_element_type=f32) + b1_ref[:, pl.ds(c0, dff_tile)]
            h1 = jnp.maximum(h1, 0.0).astype(cd)
            return acc_ff + jnp.dot(h1, w2_ref[pl.ds(c0, dff_tile), :],
                                    preferred_element_type=f32)

        ff = lax.fori_loop(0, n_dff, ffn_body,
                           jnp.zeros((tq, D), f32), unroll=2)
    ff = ff + b2_ref[...]

    # ---- residual + LayerNorm 2 (f32); lane-dense (tq, D) store ----
    o_ref[0] = _layer_norm(x1 + ff, g2_ref[...], beta2_ref[...])


# --------------------------------------------------------------------------
# Wrapper
# --------------------------------------------------------------------------
def _pick_tile(total, cands):
    for c in cands:
        if total >= c and total % c == 0:
            return c
    return total


def transformer_layer(x_sbd, params, nhead, *, q_tile=None, kv_tile=None,
                      compute_dtype=jnp.bfloat16):
    """x_sbd: (seq, batch, d_model) float32, matching the PyTorch module."""
    S, B, D = x_sbd.shape
    assert D % nhead == 0
    dh = D // nhead
    Dff = params["w1t"].shape[1]
    cd = compute_dtype
    f32 = jnp.float32

    x = jnp.transpose(x_sbd, (1, 0, 2)).astype(cd)                      # (B, S, D)

    if q_tile is None:
        q_tile = _pick_tile(S, (256, 128, 64, 32, 16, 8))
    assert S % q_tile == 0
    ns = S // q_tile
    if kv_tile is None:
        kv_tile = _pick_tile(S, (512, 256, 128))
    assert S % kv_tile == 0
    dff_tile = _pick_tile(Dff, (512, 256, 128))

    scale = 1.0 / (dh ** 0.5)
    wq = (params["wqt"] * scale).astype(cd)          # scale folded into Wq / bq
    bq = (params["bq"] * scale).astype(f32)
    wk, bk = params["wkt"].astype(cd), params["bk"].astype(f32)
    wv, bv = params["wvt"].astype(cd), params["bv"].astype(f32)
    wo, bo = params["wot"].astype(cd), params["bo"].astype(f32)
    w1, b1 = params["w1t"].astype(cd), params["b1"].astype(f32)
    w2, b2 = params["w2t"].astype(cd), params["b2"].astype(f32)
    g1, beta1 = params["g1"].astype(f32), params["beta1"].astype(f32)
    g2, beta2 = params["g2"].astype(f32), params["beta2"].astype(f32)

    # --- explicit working-set based VMEM limits (clamped to chip capacity) ---
    try:
        cap = int(pltpu.get_tpu_info().vmem_capacity_bytes)
    except Exception:
        cap = 64 * 1024 * 1024

    def _limit(work_bytes):
        lim = int(work_bytes * 1.3) + (8 << 20)
        return max(24 << 20, min(lim, int(0.9 * cap)))

    main_work = ((2 * D * D + 2 * D * Dff) * 2           # Wq,Wo,W1,W2 single-buffered bf16
                 + 2 * 2 * S * D * 2                     # K + V, double-buffered bf16
                 + 2 * q_tile * D * (2 + 4)              # x (bf16) + out (f32) dbl-buffered
                 + 2 * nhead * q_tile * kv_tile * 4      # scores + probs
                 + 2 * nhead * q_tile * dh * 4           # acc / oh
                 + q_tile * dff_tile * 4                 # FFN intermediate
                 + 6 * q_tile * D * 4)                   # q / attn / x1 / ff / out temps
    pre_work = (2 * D * D * 2 + 2 * S * D * 2            # Wk,Wv + x block
                + 2 * 2 * S * D * 2                      # K,V outputs dbl-buffered
                + 2 * S * D * 4)                         # f32 temps
    main_vmem = _limit(main_work)
    pre_vmem = _limit(pre_work)

    def run(single_buffer_consts):
        const_kwargs = ({"pipeline_mode": pl.Buffered(1)}
                        if single_buffer_consts else {})

        # ---------- pre-pass: K / V projection ----------
        def c1(shape):
            nd = len(shape)
            return pl.BlockSpec(shape, lambda b, _nd=nd: (0,) * _nd, **const_kwargs)

        kv_grid = pltpu.PrefetchScalarGridSpec(
            num_scalar_prefetch=0,
            grid=(B,),
            in_specs=[
                pl.BlockSpec((1, S, D), lambda b: (b, 0, 0)),
                c1((D, D)), c1((D, D)), c1((1, D)), c1((1, D)),
            ],
            out_specs=[
                pl.BlockSpec((1, nhead, S, dh), lambda b: (b, 0, 0, 0)),
                pl.BlockSpec((1, nhead, S, dh), lambda b: (b, 0, 0, 0)),
            ],
        )
        k_hsd, v_hsd = pl.pallas_call(
            functools.partial(kv_proj_kernel, nhead=nhead),
            out_shape=(jax.ShapeDtypeStruct((B, nhead, S, dh), cd),
                       jax.ShapeDtypeStruct((B, nhead, S, dh), cd)),
            grid_spec=kv_grid,
            compiler_params=pltpu.CompilerParams(
                dimension_semantics=("parallel",),
                vmem_limit_bytes=pre_vmem),
        )(x, wk, wv, bk, bv)

        # ---------- main layer kernel ----------
        def c2(shape):
            nd = len(shape)
            return pl.BlockSpec(shape, lambda b, s, _nd=nd: (0,) * _nd, **const_kwargs)

        grid_spec = pltpu.PrefetchScalarGridSpec(
            num_scalar_prefetch=0,
            grid=(B, ns),
            in_specs=[
                pl.BlockSpec((1, q_tile, D), lambda b, s: (b, s, 0)),        # x tile
                pl.BlockSpec((1, nhead, S, dh), lambda b, s: (b, 0, 0, 0)),  # K (per batch)
                pl.BlockSpec((1, nhead, S, dh), lambda b, s: (b, 0, 0, 0)),  # V (per batch)
                c2((D, D)), c2((1, D)),          # Wq^T, bq
                c2((D, D)), c2((1, D)),          # Wo^T, bo
                c2((1, D)), c2((1, D)),          # ln1 gamma, beta
                c2((D, Dff)), c2((1, Dff)),      # W1^T, b1
                c2((Dff, D)), c2((1, D)),        # W2^T, b2
                c2((1, D)), c2((1, D)),          # ln2 gamma, beta
            ],
            out_specs=pl.BlockSpec((1, q_tile, D), lambda b, s: (b, s, 0)),
        )
        return pl.pallas_call(
            functools.partial(transformer_layer_kernel, nhead=nhead,
                              kv_tile=kv_tile, dff_tile=dff_tile),
            out_shape=jax.ShapeDtypeStruct((B, S, D), jnp.float32),
            grid_spec=grid_spec,
            compiler_params=pltpu.CompilerParams(
                dimension_semantics=("parallel", "parallel"),
                vmem_limit_bytes=main_vmem),
        )(x, k_hsd, v_hsd, wq, bq, wo, bo, g1, beta1, w1, b1, w2, b2, g2, beta2)

    try:
        out = jax.block_until_ready(run(True))
    except Exception:
        # Fallback for Pallas builds that reject pipeline_mode=pl.Buffered(1).
        out = jax.block_until_ready(run(False))

    return jnp.transpose(out, (1, 0, 2))                                # back to (S, B, D)


# --------------------------------------------------------------------------
# Plain-JAX f32 reference (correctness check)
# --------------------------------------------------------------------------
def transformer_layer_ref(x_sbd, params, nhead):
    x = jnp.transpose(x_sbd, (1, 0, 2)).astype(jnp.float32)
    B, S, D = x.shape
    dh = D // nhead
    scale = 1.0 / (dh ** 0.5)
    q = x @ params["wqt"] + params["bq"]
    k = x @ params["wkt"] + params["bk"]
    v = x @ params["wvt"] + params["bv"]
    qh = q.reshape(B, S, nhead, dh).transpose(0, 2, 1, 3) * scale
    kh = k.reshape(B, S, nhead, dh).transpose(0, 2, 1, 3)
    vh = v.reshape(B, S, nhead, dh).transpose(0, 2, 1, 3)
    s = jnp.einsum("bhqd,bhkd->bhqk", qh, kh)
    p = jax.nn.softmax(s, axis=-1)
    o = jnp.einsum("bhqk,bhkd->bhqd", p, vh).transpose(0, 2, 1, 3).reshape(B, S, D)
    attn = o @ params["wot"] + params["bo"]

    def ln(z, g, b):
        mu = jnp.mean(z, axis=-1, keepdims=True)
        var = jnp.mean(jnp.square(z - mu), axis=-1, keepdims=True)
        return (z - mu) * lax.rsqrt(var + 1e-5) * g + b

    x1 = ln(x + attn, params["g1"], params["beta1"])
    h1 = jnp.maximum(x1 @ params["w1t"] + params["b1"], 0.0)
    ff = h1 @ params["w2t"] + params["b2"]
    x2 = ln(x1 + ff, params["g2"], params["beta2"])
    return jnp.transpose(x2, (1, 0, 2))


def init_params(key, d_model, nhead):
    dff = d_model * 4
    ks = jax.random.split(key, 10)
    sc = 0.05
    # Weights stored already transposed so the kernel does x @ W^T as x @ w*t.
    return {
        "wqt": jax.random.normal(ks[0], (d_model, d_model), jnp.float32) * sc,
        "wkt": jax.random.normal(ks[1], (d_model, d_model), jnp.float32) * sc,
        "wvt": jax.random.normal(ks[2], (d_model, d_model), jnp.float32) * sc,
        "bq": jax.random.normal(ks[3], (1, d_model), jnp.float32) * sc,
        "bk": jax.random.normal(ks[4], (1, d_model), jnp.float32) * sc,
        "bv": jax.random.normal(ks[5], (1, d_model), jnp.float32) * sc,
        "wot": jax.random.normal(ks[6], (d_model, d_model), jnp.float32) * sc,
        "bo": jnp.zeros((1, d_model), jnp.float32),
        "g1": jnp.ones((1, d_model), jnp.float32),
        "beta1": jnp.zeros((1, d_model), jnp.float32),
        "w1t": jax.random.normal(ks[7], (d_model, dff), jnp.float32) * sc,
        "b1": jax.random.normal(ks[8], (1, dff), jnp.float32) * sc,
        "w2t": jax.random.normal(ks[9], (dff, d_model), jnp.float32) * sc,
        "b2": jnp.zeros((1, d_model), jnp.float32),
        "g2": jnp.ones((1, d_model), jnp.float32),
        "beta2": jnp.zeros((1, d_model), jnp.float32),
    }


if __name__ == "__main__":
    seq_len, batch_size, d_model, nhead = 8, 2, 32, 4
    key = jax.random.PRNGKey(0)
    kx, kp = jax.random.split(key)
    x = jax.random.normal(kx, (seq_len, batch_size, d_model), jnp.float32)
    params = init_params(kp, d_model, nhead)

    # Feed bf16-representable values to BOTH paths so the f32 reference isolates
    # kernel-logic error from the intentional bf16 matmul-operand quantization.
    qz = lambda t: t.astype(jnp.bfloat16).astype(jnp.float32)
    xq = qz(x)
    params_q = jax.tree_util.tree_map(qz, params)

    out = jax.block_until_ready(transformer_layer(xq, params_q, nhead))
    ref = jax.block_until_ready(transformer_layer_ref(xq, params_q, nhead))

    assert out.shape == (seq_len, batch_size, d_model)
    max_err = float(jnp.max(jnp.abs(out - ref)))
    assert jnp.allclose(out, ref, atol=2e-2, rtol=2e-2), (
        f"mismatch vs reference, max abs err = {max_err}")
    print("KERNEL_OK")
</pallas_src>

<mosaic_0001>
module attributes {stable_mosaic.version = 11 : i64} {
  func.func @kv_proj_kernel(%arg0: i32, %arg1: memref<1x8x32xbf16, #tpu.memory_space<vmem>>, %arg2: memref<32x32xbf16, #tpu.memory_space<vmem>>, %arg3: memref<32x32xbf16, #tpu.memory_space<vmem>>, %arg4: memref<1x32xf32, #tpu.memory_space<vmem>>, %arg5: memref<1x32xf32, #tpu.memory_space<vmem>>, %arg6: memref<1x4x8x8xbf16, #tpu.memory_space<vmem>>, %arg7: memref<1x4x8x8xbf16, #tpu.memory_space<vmem>>) attributes {dimension_semantics = [#tpu.dimension_semantics<parallel>], iteration_bounds = array<i64: 2>, scalar_prefetch = 0 : i64, scratch_operands = 0 : i64, tpu.core_type = #tpu.core_type<tc>, window_params = [{transform_indices = @transform_0, window_bounds = array<i64: 1, 8, 32>}, {pipeline_mode = #tpu.pipeline_mode<synchronous>, transform_indices = @transform_1, window_bounds = array<i64: 32, 32>}, {pipeline_mode = #tpu.pipeline_mode<synchronous>, transform_indices = @transform_2, window_bounds = array<i64: 32, 32>}, {pipeline_mode = #tpu.pipeline_mode<synchronous>, transform_indices = @transform_3, window_bounds = array<i64: 1, 32>}, {pipeline_mode = #tpu.pipeline_mode<synchronous>, transform_indices = @transform_4, window_bounds = array<i64: 1, 32>}, {transform_indices = @transform_5, window_bounds = array<i64: 1, 4, 8, 8>}, {transform_indices = @transform_6, window_bounds = array<i64: 1, 4, 8, 8>}]} {
    %c0 = arith.constant 0 : index
    %c0_0 = arith.constant 0 : index
    %c0_1 = arith.constant 0 : index
    %0 = vector.load %arg1[%c0, %c0_0, %c0_1] : memref<1x8x32xbf16, #tpu.memory_space<vmem>>, vector<1x8x32xbf16>
    %1 = vector.shape_cast %0 : vector<1x8x32xbf16> to vector<8x32xbf16>
    %c0_2 = arith.constant 0 : index
    %c0_3 = arith.constant 0 : index
    %2 = vector.load %arg2[%c0_2, %c0_3] : memref<32x32xbf16, #tpu.memory_space<vmem>>, vector<32x32xbf16>
    %cst = arith.constant dense<0.000000e+00> : vector<8x32xf32>
    %3 = tpu.matmul %1, %2, %cst {dimension_numbers = #tpu.dot_dimension_numbers<[1], [0], [0], [1], [0, 0, 1, 1], [], []>} : vector<8x32xbf16>, vector<32x32xbf16>, vector<8x32xf32> -> vector<8x32xf32>
    %c0_4 = arith.constant 0 : index
    %c0_5 = arith.constant 0 : index
    %4 = vector.load %arg4[%c0_4, %c0_5] : memref<1x32xf32, #tpu.memory_space<vmem>>, vector<1x32xf32>
    %5 = vector.broadcast %4 : vector<1x32xf32> to vector<8x32xf32>
    %6 = arith.addf %3, %5 : vector<8x32xf32>
    %c0_6 = arith.constant 0 : index
    %c0_7 = arith.constant 0 : index
    %7 = vector.load %arg3[%c0_6, %c0_7] : memref<32x32xbf16, #tpu.memory_space<vmem>>, vector<32x32xbf16>
    %cst_8 = arith.constant dense<0.000000e+00> : vector<8x32xf32>
    %8 = tpu.matmul %1, %7, %cst_8 {dimension_numbers = #tpu.dot_dimension_numbers<[1], [0], [0], [1], [0, 0, 1, 1], [], []>} : vector<8x32xbf16>, vector<32x32xbf16>, vector<8x32xf32> -> vector<8x32xf32>
    %c0_9 = arith.constant 0 : index
    %c0_10 = arith.constant 0 : index
    %9 = vector.load %arg5[%c0_9, %c0_10] : memref<1x32xf32, #tpu.memory_space<vmem>>, vector<1x32xf32>
    %10 = vector.broadcast %9 : vector<1x32xf32> to vector<8x32xf32>
    %11 = arith.addf %8, %10 : vector<8x32xf32>
    %12 = arith.truncf %6 : vector<8x32xf32> to vector<8x32xbf16>
    %13 = vector.shape_cast %12 : vector<8x32xbf16> to vector<8x4x8xbf16>
    %14 = tpu.transpose %13, [1, 0, 2] : vector<8x4x8xbf16> -> vector<4x8x8xbf16>
    %c0_11 = arith.constant 0 : index
    %c0_12 = arith.constant 0 : index
    %c0_13 = arith.constant 0 : index
    %c0_14 = arith.constant 0 : index
    %15 = vector.load %arg6[%c0_11, %c0_12, %c0_13, %c0_14] : memref<1x4x8x8xbf16, #tpu.memory_space<vmem>>, vector<1x4x8x8xbf16>
    %16 = vector.shape_cast %15 : vector<1x4x8x8xbf16> to vector<4x8x8xbf16>
    %17 = vector.shape_cast %14 : vector<4x8x8xbf16> to vector<1x4x8x8xbf16>
    tpu.vector_store %arg6[%c0_11, %c0_12, %c0_13, %c0_14], %17 {strides = array<i32>} : memref<1x4x8x8xbf16, #tpu.memory_space<vmem>>, vector<1x4x8x8xbf16>,
    %18 = arith.truncf %11 : vector<8x32xf32> to vector<8x32xbf16>
    %19 = vector.shape_cast %18 : vector<8x32xbf16> to vector<8x4x8xbf16>
    %20 = tpu.transpose %19, [1, 0, 2] : vector<8x4x8xbf16> -> vector<4x8x8xbf16>
    %c0_15 = arith.constant 0 : index
    %c0_16 = arith.constant 0 : index
    %c0_17 = arith.constant 0 : index
    %c0_18 = arith.constant 0 : index
    %21 = vector.load %arg7[%c0_15, %c0_16, %c0_17, %c0_18] : memref<1x4x8x8xbf16, #tpu.memory_space<vmem>>, vector<1x4x8x8xbf16>
    %22 = vector.shape_cast %21 : vector<1x4x8x8xbf16> to vector<4x8x8xbf16>
    %23 = vector.shape_cast %20 : vector<4x8x8xbf16> to vector<1x4x8x8xbf16>
    tpu.vector_store %arg7[%c0_15, %c0_16, %c0_17, %c0_18], %23 {strides = array<i32>} : memref<1x4x8x8xbf16, #tpu.memory_space<vmem>>, vector<1x4x8x8xbf16>,
    return
  }
  func.func @transform_0(%arg0: i32) -> (i32, i32, i32) {
    %c0_i32 = arith.constant 0 : i32
    %c0_i32_0 = arith.constant 0 : i32
    %c0_i32_1 = arith.constant 0 : i32
    return %arg0, %c0_i32, %c0_i32_0 : i32, i32, i32
  }
  func.func @transform_1(%arg0: i32) -> (i32, i32) {
    %c0_i32 = arith.constant 0 : i32
    %c0_i32_0 = arith.constant 0 : i32
    %c0_i32_1 = arith.constant 0 : i32
    return %c0_i32, %c0_i32_0 : i32, i32
  }
  func.func @transform_2(%arg0: i32) -> (i32, i32) {
    %c0_i32 = arith.constant 0 : i32
    %c0_i32_0 = arith.constant 0 : i32
    %c0_i32_1 = arith.constant 0 : i32
    return %c0_i32, %c0_i32_0 : i32, i32
  }
  func.func @transform_3(%arg0: i32) -> (i32, i32) {
    %c0_i32 = arith.constant 0 : i32
    %c0_i32_0 = arith.constant 0 : i32
    %c0_i32_1 = arith.constant 0 : i32
    return %c0_i32, %c0_i32_0 : i32, i32
  }
  func.func @transform_4(%arg0: i32) -> (i32, i32) {
    %c0_i32 = arith.constant 0 : i32
    %c0_i32_0 = arith.constant 0 : i32
    %c0_i32_1 = arith.constant 0 : i32
    return %c0_i32, %c0_i32_0 : i32, i32
  }
  func.func @transform_5(%arg0: i32) -> (i32, i32, i32, i32) {
    %c0_i32 = arith.constant 0 : i32
    %c0_i32_0 = arith.constant 0 : i32
    %c0_i32_1 = arith.constant 0 : i32
    %c0_i32_2 = arith.constant 0 : i32
    return %arg0, %c0_i32, %c0_i32_0, %c0_i32_1 : i32, i32, i32, i32
  }
  func.func @transform_6(%arg0: i32) -> (i32, i32, i32, i32) {
    %c0_i32 = arith.constant 0 : i32
    %c0_i32_0 = arith.constant 0 : i32
    %c0_i32_1 = arith.constant 0 : i32
    %c0_i32_2 = arith.constant 0 : i32
    return %arg0, %c0_i32, %c0_i32_0, %c0_i32_1 : i32, i32, i32, i32
  }
}

module attributes {stable_mosaic.version = 11 : i64} {
  func.func @kv_proj_kernel(%arg0: i32, %arg1: memref<1x8x32xbf16, #tpu.memory_space<vmem>>, %arg2: memref<32x32xbf16, #tpu.memory_space<vmem>>, %arg3: memref<32x32xbf16, #tpu.memory_space<vmem>>, %arg4: memref<1x32xf32, #tpu.memory_space<vmem>>, %arg5: memref<1x32xf32, #tpu.memory_space<vmem>>, %arg6: memref<1x4x8x8xbf16, #tpu.memory_space<vmem>>, %arg7: memref<1x4x8x8xbf16, #tpu.memory_space<vmem>>) attributes {dimension_semantics = [#tpu.dimension_semantics<parallel>], iteration_bounds = array<i64: 2>, scalar_prefetch = 0 : i64, scratch_operands = 0 : i64, tpu.core_type = #tpu.core_type<tc>, window_params = [{transform_indices = @transform_0, window_bounds = array<i64: 1, 8, 32>}, {pipeline_mode = #tpu.pipeline_mode<synchronous>, transform_indices = @transform_1, window_bounds = array<i64: 32, 32>}, {pipeline_mode = #tpu.pipeline_mode<synchronous>, transform_indices = @transform_2, window_bounds = array<i64: 32, 32>}, {pipeline_mode = #tpu.pipeline_mode<synchronous>, transform_indices = @transform_3, window_bounds = array<i64: 1, 32>}, {pipeline_mode = #tpu.pipeline_mode<synchronous>, transform_indices = @transform_4, window_bounds = array<i64: 1, 32>}, {transform_indices = @transform_5, window_bounds = array<i64: 1, 4, 8, 8>}, {transform_indices = @transform_6, window_bounds = array<i64: 1, 4, 8, 8>}]} {
    %c0 = arith.constant 0 : index
    %c0_0 = arith.constant 0 : index
    %c0_1 = arith.constant 0 : index
    %0 = vector.load %arg1[%c0, %c0_0, %c0_1] : memref<1x8x32xbf16, #tpu.memory_space<vmem>>, vector<1x8x32xbf16>
    %1 = vector.shape_cast %0 : vector<1x8x32xbf16> to vector<8x32xbf16>
    %c0_2 = arith.constant 0 : index
    %c0_3 = arith.constant 0 : index
    %2 = vector.load %arg2[%c0_2, %c0_3] : memref<32x32xbf16, #tpu.memory_space<vmem>>, vector<32x32xbf16>
    %cst = arith.constant dense<0.000000e+00> : vector<8x32xf32>
    %3 = tpu.matmul %1, %2, %cst {dimension_numbers = #tpu.dot_dimension_numbers<[1], [0], [0], [1], [0, 0, 1, 1], [], []>} : vector<8x32xbf16>, vector<32x32xbf16>, vector<8x32xf32> -> vector<8x32xf32>
    %c0_4 = arith.constant 0 : index
    %c0_5 = arith.constant 0 : index
    %4 = vector.load %arg4[%c0_4, %c0_5] : memref<1x32xf32, #tpu.memory_space<vmem>>, vector<1x32xf32>
    %5 = vector.broadcast %4 : vector<1x32xf32> to vector<8x32xf32>
    %6 = arith.addf %3, %5 : vector<8x32xf32>
    %c0_6 = arith.constant 0 : index
    %c0_7 = arith.constant 0 : index
    %7 = vector.load %arg3[%c0_6, %c0_7] : memref<32x32xbf16, #tpu.memory_space<vmem>>, vector<32x32xbf16>
    %cst_8 = arith.constant dense<0.000000e+00> : vector<8x32xf32>
    %8 = tpu.matmul %1, %7, %cst_8 {dimension_numbers = #tpu.dot_dimension_numbers<[1], [0], [0], [1], [0, 0, 1, 1], [], []>} : vector<8x32xbf16>, vector<32x32xbf16>, vector<8x32xf32> -> vector<8x32xf32>
    %c0_9 = arith.constant 0 : index
    %c0_10 = arith.constant 0 : index
    %9 = vector.load %arg5[%c0_9, %c0_10] : memref<1x32xf32, #tpu.memory_space<vmem>>, vector<1x32xf32>
    %10 = vector.broadcast %9 : vector<1x32xf32> to vector<8x32xf32>
    %11 = arith.addf %8, %10 : vector<8x32xf32>
    %12 = arith.truncf %6 : vector<8x32xf32> to vector<8x32xbf16>
    %13 = vector.shape_cast %12 : vector<8x32xbf16> to vector<8x4x8xbf16>
    %14 = tpu.transpose %13, [1, 0, 2] : vector<8x4x8xbf16> -> vector<4x8x8xbf16>
    %c0_11 = arith.constant 0 : index
    %c0_12 = arith.constant 0 : index
    %c0_13 = arith.constant 0 : index
    %c0_14 = arith.constant 0 : index
    %15 = vector.load %arg6[%c0_11, %c0_12, %c0_13, %c0_14] : memref<1x4x8x8xbf16, #tpu.memory_space<vmem>>, vector<1x4x8x8xbf16>
    %16 = vector.shape_cast %15 : vector<1x4x8x8xbf16> to vector<4x8x8xbf16>
    %17 = vector.shape_cast %14 : vector<4x8x8xbf16> to vector<1x4x8x8xbf16>
    tpu.vector_store %arg6[%c0_11, %c0_12, %c0_13, %c0_14], %17 {strides = array<i32>} : memref<1x4x8x8xbf16, #tpu.memory_space<vmem>>, vector<1x4x8x8xbf16>,
    %18 = arith.truncf %11 : vector<8x32xf32> to vector<8x32xbf16>
    %19 = vector.shape_cast %18 : vector<8x32xbf16> to vector<8x4x8xbf16>
    %20 = tpu.transpose %19, [1, 0, 2] : vector<8x4x8xbf16> -> vector<4x8x8xbf16>
    %c0_15 = arith.constant 0 : index
    %c0_16 = arith.constant 0 : index
    %c0_17 = arith.constant 0 : index
    %c0_18 = arith.constant 0 : index
    %21 = vector.load %arg7[%c0_15, %c0_16, %c0_17, %c0_18] : memref<1x4x8x8xbf16, #tpu.memory_space<vmem>>, vector<1x4x8x8xbf16>
    %22 = vector.shape_cast %21 : vector<1x4x8x8xbf16> to vector<4x8x8xbf16>
    %23 = vector.shape_cast %20 : vector<4x8x8xbf16> to vector<1x4x8x8xbf16>
    tpu.vector_store %arg7[%c0_15, %c0_16, %c0_17, %c0_18], %23 {strides = array<i32>} : memref<1x4x8x8xbf16, #tpu.memory_space<vmem>>, vector<1x4x8x8xbf16>,
    return
  }
  func.func @transform_0(%arg0: i32) -> (i32, i32, i32) {
    %c0_i32 = arith.constant 0 : i32
    %c0_i32_0 = arith.constant 0 : i32
    %c0_i32_1 = arith.constant 0 : i32
    return %arg0, %c0_i32, %c0_i32_0 : i32, i32, i32
  }
  func.func @transform_1(%arg0: i32) -> (i32, i32) {
    %c0_i32 = arith.constant 0 : i32
    %c0_i32_0 = arith.constant 0 : i32
    %c0_i32_1 = arith.constant 0 : i32
    return %c0_i32, %c0_i32_0 : i32, i32
  }
  func.func @transform_2(%arg0: i32) -> (i32, i32) {
    %c0_i32 = arith.constant 0 : i32
    %c0_i32_0 = arith.constant 0 : i32
    %c0_i32_1 = arith.constant 0 : i32
    return %c0_i32, %c0_i32_0 : i32, i32
  }
  func.func @transform_3(%arg0: i32) -> (i32, i32) {
    %c0_i32 = arith.constant 0 : i32
    %c0_i32_0 = arith.constant 0 : i32
    %c0_i32_1 = arith.constant 0 : i32
    return %c0_i32, %c0_i32_0 : i32, i32
  }
  func.func @transform_4(%arg0: i32) -> (i32, i32) {
    %c0_i32 = arith.constant 0 : i32
    %c0_i32_0 = arith.constant 0 : i32
    %c0_i32_1 = arith.constant 0 : i32
    return %c0_i32, %c0_i32_0 : i32, i32
  }
  func.func @transform_5(%arg0: i32) -> (i32, i32, i32, i32) {
    %c0_i32 = arith.constant 0 : i32
    %c0_i32_0 = arith.constant 0 : i32
    %c0_i32_1 = arith.constant 0 : i32
    %c0_i32_2 = arith.constant 0 : i32
    return %arg0, %c0_i32, %c0_i32_0, %c0_i32_1 : i32, i32, i32, i32
  }
  func.func @transform_6(%arg0: i32) -> (i32, i32, i32, i32) {
    %c0_i32 = arith.constant 0 : i32
    %c0_i32_0 = arith.constant 0 : i32
    %c0_i32_1 = arith.constant 0 : i32
    %c0_i32_2 = arith.constant 0 : i32
    return %arg0, %c0_i32, %c0_i32_0, %c0_i32_1 : i32, i32, i32, i32
  }
}

</mosaic_0001>

<llo_original>
// kernel: tpu_custom_call.1
$region0: #{tpu_custom_call.1}
  #allocation0 [shape = 'u32[]', space=smem, size = 0x4, offset = 0x4, fixed_abs, tag = 'smem constant byte address 0x4 - core index']
  #allocation1 [shape = 'u32[144,128]{1,0:T(1,128)}', space=vmem, size = 0x12000, scoped, tag = 'internal scratch']
  %s0 = inlined_call_operand.hbm [shape: bf16[2,8,32], index: 0, kind: input, shape index: {}]
  %s1 = inlined_call_operand.hbm [shape: bf16[32,32], index: 1, kind: input, shape index: {}]
  %s2 = inlined_call_operand.hbm [shape: bf16[32,32], index: 2, kind: input, shape index: {}]
  %s3 = inlined_call_operand.vmem [shape: f32[1,32], index: 3, kind: input, shape index: {}]
  %s4 = inlined_call_operand.vmem [shape: f32[1,32], index: 4, kind: input, shape index: {}]
  %s5 = inlined_call_operand.hbm [shape: bf16[2,4,8,8], index: 5, kind: output, shape index: {0}]
  %s6 = inlined_call_operand.hbm [shape: bf16[2,4,8,8], index: 6, kind: output, shape index: {1}]
  %7 = xla_tuple %s5, %s6
  %s8 = sld [smem:[#allocation0]]
  $region73: #{tpu_custom_call.1} parent=0
    _
  %s10 = ssub.s32 1, %s8
  %s11 = scalar_select 0, %s10, %s8
  $region1: #{tpu_custom_call.1} parent=0
    #allocation2 [shape = 'u8[4096]{0}', space=vmem, size = 0x1000, scoped, tag = 'input window, operand 0']
    #allocation3 [shape = 's32[2]{0}', space=sflag, size = 0x8, scoped, tag = 'scoped memory for tpu_custom_call.1']
    #allocation4 [shape = 's32[2]{0}', space=sflag, size = 0x8, scoped, tag = 'scoped memory for tpu_custom_call.1']
    #allocation5 [shape = 'u8[8192]{0}', space=vmem, size = 0x2000, scoped, tag = 'input window, operand 1, single buffered']
    #allocation6 [shape = 's32[1]{0}', space=sflag, size = 0x4, scoped, tag = 'scoped memory for tpu_custom_call.1']
    #allocation7 [shape = 'u8[8192]{0}', space=vmem, size = 0x2000, scoped, tag = 'input window, operand 2, single buffered']
    #allocation8 [shape = 'u8[16384]{0}', space=vmem, size = 0x4000, scoped, tag = 'output window, operand 0']
    #allocation9 [shape = 'u8[16384]{0}', space=vmem, size = 0x4000, scoped, tag = 'output window, operand 1']
    #allocation10 [shape = 's32[2]{0}', space=sflag, size = 0x8, scoped, tag = 'scoped memory for tpu_custom_call.1']
    %12 = vsyncpa [#allocation3], 0
    %s13 = scalar_lea.sflag [#allocation3], 1
    %14 = vsyncpa %s13, 0
    %15 = vsyncpa [#allocation6], 0
    %16 = vsyncpa [#allocation4], 0
    %s17 = scalar_lea.sflag [#allocation4], 1
    %18 = vsyncpa %s17, 0
    %19 = vsyncpa [#allocation10], 0
    %s20 = scalar_lea.sflag [#allocation10], 1
    %21 = vsyncpa %s20, 0
    loop: start=0, step=1, limit=4
    $region2: #{tpu_custom_call.1} parent=1 // loop_pre_header
      _
    $region3: #{tpu_custom_call.1} parent=1 // loop_header
      %s23 = sphi 0, %s27
      %p24 = scmp.ge.s32.totalorder %s23, 4
      %s33 = sphi 0, %s35
      %s36 = sphi 0, %s33
      %s37 = sphi 0, %s36
      %s53 = sphi 0, %s37
      %s57 = sphi 0, %s57
      %s59 = sphi 0, %s57
      %s60 = sphi 0, %s59
      %s74 = sphi 0, %s60
      %s78 = sphi 0, %s78
      %s80 = sphi 0, %s78
      %s81 = sphi 0, %s80
      %s95 = sphi 0, %s81
      %s99 = sphi 0, %s99
      %s101 = sphi 0, %s99
      %s102 = sphi 0, %s101
      %s116 = sphi 0, %s102
      %s120 = sphi 0, %s120
      %s122 = sphi 0, %s120
      %s123 = sphi 0, %s122
      %s137 = sphi 0, %s123
      %s143 = sphi 0, %s145
      %s146 = sphi 0, %s143
      %s147 = sphi 0, %s146
      %s163 = sphi 0, %s147
      %s169 = sphi 0, %s171
      %s172 = sphi 0, %s169
      %s173 = sphi 0, %s172
      %s189 = sphi 0, %s173
    $region4: #{tpu_custom_call.1} parent=1 // loop_header_branch
      %26 = sbr.rel (%p24) target = $region8
    $region5: #{tpu_custom_call.1} parent=1 // loop_body
      %s28 = ssub.s32 %s23, 1
      %s29 = ssub.s32 %s23, 2
      %s30 = sadd.s32 %s23, 1
      %s31 = ssub.s32 %s23, %s30
      %p32 = scmp.eq.s32.totalorder %s31, 0
      %s34 = sadd.s32 %s33, 1
      %s35 = scalar_select %p32, %s33, %s34
      %p38 = pneg %p32
      %p39 = scmp.eq.s32.totalorder %s23, 1
      %p40 = por %p38, %p39
      %p41 = scmp.ne.s32.totalorder %s33, %s36
      %p42 = scmp.eq.s32.totalorder %s23, 0
      %p43 = por %p41, %p42
      %p44 = scmp.ne.s32.totalorder %s33, %s36
      %p45 = scmp.eq.s32.totalorder %s28, 1
      %p46 = por %p44, %p45
      %p47 = scmp.ne.s32.totalorder %s36, %s37
      %p48 = scmp.eq.s32.totalorder %s28, 0
      %p49 = por %p47, %p48
      %p50 = scmp.ne.s32.totalorder %s36, %s37
      %p51 = scmp.eq.s32.totalorder %s29, 1
      %p52 = por %p50, %p51
      %p54 = scmp.ne.s32.totalorder %s37, %s53
      %p55 = scmp.eq.s32.totalorder %s29, 0
      %p56 = por %p54, %p55
      %s58 = sadd.s32 %s57, 1
      %p61 = scmp.eq.s32.totalorder %s23, 1
      %p62 = scmp.ne.s32.totalorder %s57, %s59
      %p63 = scmp.eq.s32.totalorder %s23, 0
      %p64 = por %p62, %p63
      %p65 = scmp.ne.s32.totalorder %s57, %s59
      %p66 = scmp.eq.s32.totalorder %s28, 1
      %p67 = por %p65, %p66
      %p68 = scmp.ne.s32.totalorder %s59, %s60
      %p69 = scmp.eq.s32.totalorder %s28, 0
      %p70 = por %p68, %p69
      %p71 = scmp.ne.s32.totalorder %s59, %s60
      %p72 = scmp.eq.s32.totalorder %s29, 1
      %p73 = por %p71, %p72
      %p75 = scmp.ne.s32.totalorder %s60, %s74
      %p76 = scmp.eq.s32.totalorder %s29, 0
      %p77 = por %p75, %p76
      %s79 = sadd.s32 %s78, 1
      %p82 = scmp.eq.s32.totalorder %s23, 1
      %p83 = scmp.ne.s32.totalorder %s78, %s80
      %p84 = scmp.eq.s32.totalorder %s23, 0
      %p85 = por %p83, %p84
      %p86 = scmp.ne.s32.totalorder %s78, %s80
      %p87 = scmp.eq.s32.totalorder %s28, 1
      %p88 = por %p86, %p87
      %p89 = scmp.ne.s32.totalorder %s80, %s81
      %p90 = scmp.eq.s32.totalorder %s28, 0
      %p91 = por %p89, %p90
      %p92 = scmp.ne.s32.totalorder %s80, %s81
      %p93 = scmp.eq.s32.totalorder %s29, 1
      %p94 = por %p92, %p93
      %p96 = scmp.ne.s32.totalorder %s81, %s95
      %p97 = scmp.eq.s32.totalorder %s29, 0
      %p98 = por %p96, %p97
      %s100 = sadd.s32 %s99, 1
      %p103 = scmp.eq.s32.totalorder %s23, 1
      %p104 = scmp.ne.s32.totalorder %s99, %s101
      %p105 = scmp.eq.s32.totalorder %s23, 0
      %p106 = por %p104, %p105
      %p107 = scmp.ne.s32.totalorder %s99, %s101
      %p108 = scmp.eq.s32.totalorder %s28, 1
      %p109 = por %p107, %p108
      %p110 = scmp.ne.s32.totalorder %s101, %s102
      %p111 = scmp.eq.s32.totalorder %s28, 0
      %p112 = por %p110, %p111
      %p113 = scmp.ne.s32.totalorder %s101, %s102
      %p114 = scmp.eq.s32.totalorder %s29, 1
      %p115 = por %p113, %p114
      %p117 = scmp.ne.s32.totalorder %s102, %s116
      %p118 = scmp.eq.s32.totalorder %s29, 0
      %p119 = por %p117, %p118
      %s121 = sadd.s32 %s120, 1
      %p124 = scmp.eq.s32.totalorder %s23, 1
      %p125 = scmp.ne.s32.totalorder %s120, %s122
      %p126 = scmp.eq.s32.totalorder %s23, 0
      %p127 = por %p125, %p126
      %p128 = scmp.ne.s32.totalorder %s120, %s122
      %p129 = scmp.eq.s32.totalorder %s28, 1
      %p130 = por %p128, %p129
      %p131 = scmp.ne.s32.totalorder %s122, %s123
      %p132 = scmp.eq.s32.totalorder %s28, 0
      %p133 = por %p131, %p132
      %p134 = scmp.ne.s32.totalorder %s122, %s123
      %p135 = scmp.eq.s32.totalorder %s29, 1
      %p136 = por %p134, %p135
      %p138 = scmp.ne.s32.totalorder %s123, %s137
      %p139 = scmp.eq.s32.totalorder %s29, 0
      %p140 = por %p138, %p139
      %s141 = ssub.s32 %s23, %s30
      %p142 = scmp.eq.s32.totalorder %s141, 0
      %s144 = sadd.s32 %s143, 1
      %s145 = scalar_select %p142, %s143, %s144
      %p148 = pneg %p142
      %p149 = scmp.eq.s32.totalorder %s23, 1
      %p150 = por %p148, %p149
      %p151 = scmp.ne.s32.totalorder %s143, %s146
      %p152 = scmp.eq.s32.totalorder %s23, 0
      %p153 = por %p151, %p152
      %p154 = scmp.ne.s32.totalorder %s143, %s146
      %p155 = scmp.eq.s32.totalorder %s28, 1
      %p156 = por %p154, %p155
      %p157 = scmp.ne.s32.totalorder %s146, %s147
      %p158 = scmp.eq.s32.totalorder %s28, 0
      %p159 = por %p157, %p158
      %p160 = scmp.ne.s32.totalorder %s146, %s147
      %p161 = scmp.eq.s32.totalorder %s29, 1
      %p162 = por %p160, %p161
      %p164 = scmp.ne.s32.totalorder %s147, %s163
      %p165 = scmp.eq.s32.totalorder %s29, 0
      %p166 = por %p164, %p165
      %s167 = ssub.s32 %s23, %s30
      %p168 = scmp.eq.s32.totalorder %s167, 0
      %s170 = sadd.s32 %s169, 1
      %s171 = scalar_select %p168, %s169, %s170
      %p174 = pneg %p168
      %p175 = scmp.eq.s32.totalorder %s23, 1
      %p176 = por %p174, %p175
      %p177 = scmp.ne.s32.totalorder %s169, %s172
      %p178 = scmp.eq.s32.totalorder %s23, 0
      %p179 = por %p177, %p178
      %p180 = scmp.ne.s32.totalorder %s169, %s172
      %p181 = scmp.eq.s32.totalorder %s28, 1
      %p182 = por %p180, %p181
      %p183 = scmp.ne.s32.totalorder %s172, %s173
      %p184 = scmp.eq.s32.totalorder %s28, 0
      %p185 = por %p183, %p184
      %p186 = scmp.ne.s32.totalorder %s172, %s173
      %p187 = scmp.eq.s32.totalorder %s29, 1
      %p188 = por %p186, %p187
      %p190 = scmp.ne.s32.totalorder %s173, %s189
      %p191 = scmp.eq.s32.totalorder %s29, 0
      %p192 = por %p190, %p191
      %p193 = scmp.le.s32.totalorder 1, %s23
      %p194 = scmp.lt.s32.totalorder %s23, 3
      %p195 = pnand %p193, %p194
      %p196 = pneg %p195
      // Predicated region
      $region9: #{tpu_custom_call.1} parent=5 // pred_check
        _
      $region10: #{tpu_custom_call.1} parent=5 // pred_check_branch
        %198 = sbr.rel (%p195) target = $region12
      $region11: #{tpu_custom_call.1} parent=5 // pred_region
        %s199 = ssub.s32 %s23, 1
        // Predicated region
        $region13: #{tpu_custom_call.1} parent=11 // pred_check
          %p200 = pneg %p70
        $region14: #{tpu_custom_call.1} parent=11 // pred_check_branch
          %202 = sbr.rel (%p200) target = $region16
        $region15: #{tpu_custom_call.1} parent=11 // pred_region
          %s204 = ssub.s32 256, 256
          %205 = vsyncadd [#allocation6], %s204
          %s206 = sshll.u32 [#allocation5], 4
          %s207 = int_to_ptr.vmem [resolvable:$true] %s206
          %212 = dma.hbm_to_vmem [thread:$0]  %s1, 256, %s207, [#allocation6], 64, 64, 4
        $region16: #{tpu_custom_call.1} parent=11 // pred_fallthru
          _
        // Predicated region
        $region17: #{tpu_custom_call.1} parent=11 // pred_check
          %p213 = pneg %p91
        $region18: #{tpu_custom_call.1} parent=11 // pred_check_branch
          %215 = sbr.rel (%p213) target = $region20
        $region19: #{tpu_custom_call.1} parent=11 // pred_region
          %s217 = ssub.s32 256, 256
          %218 = vsyncadd [#allocation6], %s217
          %s219 = sshll.u32 [#allocation7], 4
          %s220 = int_to_ptr.vmem [resolvable:$true] %s219
          %225 = dma.hbm_to_vmem [thread:$0]  %s2, 256, %s220, [#allocation6], 64, 64, 4
        $region20: #{tpu_custom_call.1} parent=11 // pred_fallthru
          _
        // Predicated region
        $region21: #{tpu_custom_call.1} parent=11 // pred_check
          %p226 = pneg %p112
        $region22: #{tpu_custom_call.1} parent=11 // pred_check_branch
          %228 = sbr.rel (%p226) target = $region24
        $region23: #{tpu_custom_call.1} parent=11 // pred_region
          _
        $region24: #{tpu_custom_call.1} parent=11 // pred_fallthru
          _
        // Predicated region
        $region25: #{tpu_custom_call.1} parent=11 // pred_check
          %p229 = pneg %p133
        $region26: #{tpu_custom_call.1} parent=11 // pred_check_branch
          %231 = sbr.rel (%p229) target = $region28
        $region27: #{tpu_custom_call.1} parent=11 // pred_region
          _
        $region28: #{tpu_custom_call.1} parent=11 // pred_fallthru
          _
      $region12: #{tpu_custom_call.1} parent=5 // pred_fallthru
        _
      %p232 = scmp.lt.s32.totalorder %s23, 2
      // Predicated region
      $region29: #{tpu_custom_call.1} parent=5 // pred_check
        %p233 = pneg %p232
      $region30: #{tpu_custom_call.1} parent=5 // pred_check_branch
        %235 = sbr.rel (%p233) target = $region32
      $region31: #{tpu_custom_call.1} parent=5 // pred_region
        // Predicated region
        $region33: #{tpu_custom_call.1} parent=31 // pred_check
          %p236 = pneg %p43
        $region34: #{tpu_custom_call.1} parent=31 // pred_check_branch
          %238 = sbr.rel (%p236) target = $region36
        $region35: #{tpu_custom_call.1} parent=31 // pred_region
          %s239 = sand.u32 %s33, 1
          %s240 = scalar_lea.sflag [#allocation3], %s239
          %s241 = sand.u32 %s33, 1
          %s242 = smul.addr %s241, 4
          %s243 = scalar_lea.vmem [#allocation2], %s242
          %s245 = ssub.s32 64, 64
          %246 = vsyncadd %s240, %s245
          %s247 = smul.addr %s23, 64
          %s248 = scalar_lea.hbm %s0, %s247
          %s250 = sshll.u32 %s243, 4
          %s251 = int_to_ptr.vmem [resolvable:$true] %s250
          %253 = dma.hbm_to_vmem [thread:$0]  %s248, 64, %s251, %s240
        $region36: #{tpu_custom_call.1} parent=31 // pred_fallthru
          _
      $region32: #{tpu_custom_call.1} parent=5 // pred_fallthru
        _
      %p254 = scmp.le.s32.totalorder 1, %s23
      %p255 = scmp.lt.s32.totalorder %s23, 3
      %p256 = pnand %p254, %p255
      %p257 = pneg %p256
      // Predicated region
      $region37: #{tpu_custom_call.1} parent=5 // pred_check
        _
      $region38: #{tpu_custom_call.1} parent=5 // pred_check_branch
        %259 = sbr.rel (%p256) target = $region40
      $region39: #{tpu_custom_call.1} parent=5 // pred_region
        %s260 = ssub.s32 %s23, 1
        %s261 = sand.u32 %s36, 1
        %s262 = scalar_lea.sflag [#allocation3], %s261
        %s263 = sand.u32 %s36, 1
        %s264 = smul.addr %s263, 4
        %s265 = scalar_lea.vmem [#allocation2], %s264
        // Predicated region
        $region41: #{tpu_custom_call.1} parent=39 // pred_check
          %p266 = pneg %p49
        $region42: #{tpu_custom_call.1} parent=39 // pred_check_branch
          %268 = sbr.rel (%p266) target = $region44
        $region43: #{tpu_custom_call.1} parent=39 // pred_region
          %269 = dma.done %s262, 64
        $region44: #{tpu_custom_call.1} parent=39 // pred_fallthru
          _
        // Predicated region
        $region45: #{tpu_custom_call.1} parent=39 // pred_check
          %p270 = pneg %p70
        $region46: #{tpu_custom_call.1} parent=39 // pred_check_branch
          %272 = sbr.rel (%p270) target = $region48
        $region47: #{tpu_custom_call.1} parent=39 // pred_region
          %273 = dma.done [#allocation6], 256
        $region48: #{tpu_custom_call.1} parent=39 // pred_fallthru
          _
        // Predicated region
        $region49: #{tpu_custom_call.1} parent=39 // pred_check
          %p274 = pneg %p91
        $region50: #{tpu_custom_call.1} parent=39 // pred_check_branch
          %276 = sbr.rel (%p274) target = $region52
        $region51: #{tpu_custom_call.1} parent=39 // pred_region
          %277 = dma.done [#allocation6], 256
        $region52: #{tpu_custom_call.1} parent=39 // pred_fallthru
          _
        %s278 = sand.u32 %s36, 1
        %s279 = scalar_lea.sflag [#allocation3], %s278
        %s280 = sand.u32 %s36, 1
        %s281 = smul.addr %s280, 4
        %s282 = scalar_lea.vmem [#allocation2], %s281
        %p283 = pneg %p49
        %p284 = pneg %p46
        %p285 = pneg %p70
        %p286 = pneg %p67
        %p287 = pneg %p91
        %p288 = pneg %p88
        %p289 = pneg %p112
        %p290 = pneg %p109
        %p291 = pneg %p133
        %p292 = pneg %p130
        %p293 = pneg %p159
        %p294 = pneg %p156
        %s295 = sand.u32 %s146, 1
        %s296 = scalar_lea.sflag [#allocation4], %s295
        %s297 = sand.u32 %s146, 1
        %s298 = smul.addr %s297, 16
        %s299 = scalar_lea.vmem [#allocation8], %s298
        %p300 = pneg %p185
        %p301 = pneg %p182
        %s302 = sand.u32 %s172, 1
        %s303 = scalar_lea.sflag [#allocation10], %s302
        %s304 = sand.u32 %s172, 1
        %s305 = smul.addr %s304, 16
        %s306 = scalar_lea.vmem [#allocation9], %s305
        %v308 = vld [vmem:[%s265] sm:$0xf]
        %v309 = vld [vmem:[#allocation5] sm:$0xf]
        %v310 = vld [vmem:[#allocation5 + $0x4] sm:$0xf]
        %v311 = vld [vmem:[#allocation5 + $0x8] sm:$0xf]
        %v312 = vld [vmem:[#allocation5 + $0xc] sm:$0xf]
        %v313 = vld [vmem:[%s3] sm:$0x1]
        %v315 = vlaneseq
        %v316 = vshrl.u32 %v315, 7
        %v317 = vsub.s32 0, %v316
        %v318 = vrot.slane %v313, %v317
        %v324 = vunpack.c.l.b16 %v309
        %v325 = vunpack.c.l.b16 %v310
        %v326 = vunpack.c.l.b16 %v311
        %v327 = vunpack.c.l.b16 %v312
        %v328 = vpack.c.b16 %v325, %v324
        %v329 = vpack.c.b16 %v327, %v326
        %vm332 = vcmask 261120
        %v334 = vsel %vm332, %v308, 0
        %336 = vmatprep.subr.bf16.mxu0 0
        %337 = vmatpush1.bf16.msra.mxu0 %v328
        %338 = vmatprep.subr.bf16.mxu0 0
        %339 = vmatpush1.bf16.msra.mxu0 %v329
        %340 = vmatprep.subr.bf16.mxu0 0
        %341 = vmatpush1.bf16.msra.mxu0 0
        %342 = vmatprep.subr.bf16.mxu0 0
        %343 = vmatpush1.bf16.msra.mxu0 0
        %344 = vmatprep.subr.bf16.mxu0 0
        %345 = vmatpush1.bf16.msra.mxu0 0
        %346 = vmatprep.subr.bf16.mxu0 0
        %347 = vmatpush1.bf16.msra.mxu0 0
        %348 = vmatprep.subr.bf16.mxu0 0
        %349 = vmatpush1.bf16.msra.mxu0 0
        %350 = vmatprep.subr.bf16.mxu0 0
        %351 = vmatpush1.bf16.msra.mxu0 0
        %352 = vmatprep.subr.bf16.mxu0 0
        %353 = vmatpush1.bf16.msra.mxu0 0
        %354 = vmatprep.subr.bf16.mxu0 0
        %355 = vmatpush1.bf16.msra.mxu0 0
        %356 = vmatprep.subr.bf16.mxu0 0
        %357 = vmatpush1.bf16.msra.mxu0 0
        %358 = vmatprep.subr.bf16.mxu0 0
        %359 = vmatpush1.bf16.msra.mxu0 0
        %360 = vmatprep.subr.bf16.mxu0 0
        %361 = vmatpush1.bf16.msra.mxu0 0
        %362 = vmatprep.subr.bf16.mxu0 0
        %363 = vmatpush1.bf16.msra.mxu0 0
        %364 = vmatprep.subr.bf16.mxu0 0
        %365 = vmatpush1.bf16.msra.mxu0 0
        %366 = vmatprep.subr.bf16.mxu0 0
        %367 = vmatpush1.bf16.msra.mxu0 0
        %368 = vmatprep.mubr.bf16.mxu0 0
        %369 = vmatmul.mubr.bf16.gmra.mrb[0].mxu0 %v334
        %v370 = vpop.f32.mrb[0].mxu0
        %v371 = vadd.f32 %v318, %v370
        %v372 = vpop.f32.mrb[0].mxu0
        %v373 = vpop.f32.mrb[0].mxu0
        %v374 = vpop.f32.mrb[0].mxu0
        %375 = vdwg.mxu0
        %v376 = vld [vmem:[#allocation7] sm:$0xf]
        %v377 = vld [vmem:[#allocation7 + $0x4] sm:$0xf]
        %v378 = vld [vmem:[#allocation7 + $0x8] sm:$0xf]
        %v379 = vld [vmem:[#allocation7 + $0xc] sm:$0xf]
        %v380 = vld [vmem:[%s4] sm:$0x1]
        %v382 = vlaneseq
        %v383 = vshrl.u32 %v382, 7
        %v384 = vsub.s32 0, %v383
        %v385 = vrot.slane %v380, %v384
        %v391 = vunpack.c.l.b16 %v376
        %v392 = vunpack.c.l.b16 %v377
        %v393 = vunpack.c.l.b16 %v378
        %v394 = vunpack.c.l.b16 %v379
        %v395 = vpack.c.b16 %v392, %v391
        %v396 = vpack.c.b16 %v394, %v393
        %399 = vmatprep.subr.bf16.mxu0 0
        %400 = vmatpush1.bf16.msra.mxu0 %v395
        %401 = vmatprep.subr.bf16.mxu0 0
        %402 = vmatpush1.bf16.msra.mxu0 %v396
        %403 = vmatprep.subr.bf16.mxu0 0
        %404 = vmatpush1.bf16.msra.mxu0 0
        %405 = vmatprep.subr.bf16.mxu0 0
        %406 = vmatpush1.bf16.msra.mxu0 0
        %407 = vmatprep.subr.bf16.mxu0 0
        %408 = vmatpush1.bf16.msra.mxu0 0
        %409 = vmatprep.subr.bf16.mxu0 0
        %410 = vmatpush1.bf16.msra.mxu0 0
        %411 = vmatprep.subr.bf16.mxu0 0
        %412 = vmatpush1.bf16.msra.mxu0 0
        %413 = vmatprep.subr.bf16.mxu0 0
        %414 = vmatpush1.bf16.msra.mxu0 0
        %415 = vmatprep.subr.bf16.mxu0 0
        %416 = vmatpush1.bf16.msra.mxu0 0
        %417 = vmatprep.subr.bf16.mxu0 0
        %418 = vmatpush1.bf16.msra.mxu0 0
        %419 = vmatprep.subr.bf16.mxu0 0
        %420 = vmatpush1.bf16.msra.mxu0 0
        %421 = vmatprep.subr.bf16.mxu0 0
        %422 = vmatpush1.bf16.msra.mxu0 0
        %423 = vmatprep.subr.bf16.mxu0 0
        %424 = vmatpush1.bf16.msra.mxu0 0
        %425 = vmatprep.subr.bf16.mxu0 0
        %426 = vmatpush1.bf16.msra.mxu0 0
        %427 = vmatprep.subr.bf16.mxu0 0
        %428 = vmatpush1.bf16.msra.mxu0 0
        %429 = vmatprep.subr.bf16.mxu0 0
        %430 = vmatpush1.bf16.msra.mxu0 0
        %431 = vmatprep.mubr.bf16.mxu0 0
        %432 = vmatmul.mubr.bf16.gmra.mrb[0].mxu0 %v334
        %v433 = vpop.f32.mrb[0].mxu0
        %v434 = vadd.f32 %v385, %v433
        %v435 = vpop.f32.mrb[0].mxu0
        %v436 = vpop.f32.mrb[0].mxu0
        %v437 = vpop.f32.mrb[0].mxu0
        %438 = vdwg.mxu0
        %v439 = vpack.c.bf16 %v371, %v371
        %441 = vrot.lane.b32.xlu0 %v439, 120
        %v442 = vpop.permute.xlu0 %441
        %443 = vrot.lane.b32.xlu0 %v439, 112
        %v444 = vpop.permute.xlu0 %443
        %445 = vrot.lane.b32.xlu0 %v439, 104
        %v446 = vpop.permute.xlu0 %445
        %v448 = vunpack.c.l.s4 1983009808
        %v449 = vunpack.c.0.s8 %v448
        %v450 = vlaneseq
        %v451 = vshrl.u32 %v450, 7
        %v452 = vsub.s32 %v449, %v451
        %v453 = vrot.slane %v439, %v452
        %v456 = vunpack.c.l.s4 1983009808
        %v457 = vunpack.c.0.s8 %v456
        %v458 = vlaneseq
        %v459 = vshrl.u32 %v458, 7
        %v460 = vsub.s32 %v457, %v459
        %v461 = vrot.slane %v444, %v460
        %v462 = vcombine.low %v453, %v461
        %v463 = vcombine.high %v453, %v461
        %v465 = vunpack.c.l.s4 1934713408
        %v466 = vunpack.c.0.s8 %v465
        %v467 = vlaneseq
        %v468 = vshrl.u32 %v467, 7
        %v469 = vsub.s32 %v466, %v468
        %v470 = vrot.slane %v462, %v469
        %v472 = vunpack.c.l.s4 1934713408
        %v473 = vunpack.c.0.s8 %v472
        %v474 = vlaneseq
        %v475 = vshrl.u32 %v474, 7
        %v476 = vsub.s32 %v473, %v475
        %v477 = vrot.slane %v463, %v476
        %v478 = vcombine.high %v470, 0
        %v479 = vcombine.high %v477, 0
        %v482 = vunpack.c.l.s4 1983009808
        %v483 = vunpack.c.0.s8 %v482
        %v484 = vlaneseq
        %v485 = vshrl.u32 %v484, 7
        %v486 = vsub.s32 %v483, %v485
        %v487 = vrot.slane %v442, %v486
        %v490 = vunpack.c.l.s4 1983009808
        %v491 = vunpack.c.0.s8 %v490
        %v492 = vlaneseq
        %v493 = vshrl.u32 %v492, 7
        %v494 = vsub.s32 %v491, %v493
        %v495 = vrot.slane %v446, %v494
        %v496 = vcombine.low %v487, %v495
        %v497 = vcombine.high %v487, %v495
        %v499 = vunpack.c.l.s4 1934713408
        %v500 = vunpack.c.0.s8 %v499
        %v501 = vlaneseq
        %v502 = vshrl.u32 %v501, 7
        %v503 = vsub.s32 %v500, %v502
        %v504 = vrot.slane %v496, %v503
        %v506 = vunpack.c.l.s4 1934713408
        %v507 = vunpack.c.0.s8 %v506
        %v508 = vlaneseq
        %v509 = vshrl.u32 %v508, 7
        %v510 = vsub.s32 %v507, %v509
        %v511 = vrot.slane %v497, %v510
        %v512 = vcombine.high %v504, 0
        %v513 = vcombine.high %v511, 0
        %v516 = vpack.i.b16 %v504, %v470
        %v518 = vshrl.u32 %v470, 16
        %v519 = vshrl.u32 %v504, 16
        %v520 = vpack.i.b16 %v519, %v518
        %v524 = vpack.i.b16 %v512, %v478
        %v526 = vshrl.u32 %v478, 16
        %v527 = vshrl.u32 %v512, 16
        %v528 = vpack.i.b16 %v527, %v526
        %v532 = vpack.i.b16 %v511, %v477
        %v534 = vshrl.u32 %v477, 16
        %v535 = vshrl.u32 %v511, 16
        %v536 = vpack.i.b16 %v535, %v534
        %v540 = vpack.i.b16 %v513, %v479
        %v542 = vshrl.u32 %v479, 16
        %v543 = vshrl.u32 %v513, 16
        %v544 = vpack.i.b16 %v543, %v542
        %v546 = vcombine.low %v516, %v532
        %v548 = vunpack.c.l.s4 1983009808
        %v549 = vunpack.c.0.s8 %v548
        %v550 = vlaneseq
        %v551 = vshrl.u32 %v550, 7
        %v552 = vsub.s32 %v549, %v551
        %v553 = vrot.slane %v546, %v552
        %v554 = vcombine.low %v524, %v540
        %v556 = vunpack.c.l.s4 1983009808
        %v557 = vunpack.c.0.s8 %v556
        %v558 = vlaneseq
        %v559 = vshrl.u32 %v558, 7
        %v560 = vsub.s32 %v557, %v559
        %v561 = vrot.slane %v554, %v560
        %v562 = vcombine.low %v553, %v561
        %v564 = vunpack.c.l.s4 1934713408
        %v565 = vunpack.c.0.s8 %v564
        %v566 = vlaneseq
        %v567 = vshrl.u32 %v566, 7
        %v568 = vsub.s32 %v565, %v567
        %v569 = vrot.slane %v562, %v568
        %v570 = vcombine.high %v569, 0
        %v571 = vcombine.low %v520, %v536
        %v573 = vunpack.c.l.s4 1983009808
        %v574 = vunpack.c.0.s8 %v573
        %v575 = vlaneseq
        %v576 = vshrl.u32 %v575, 7
        %v577 = vsub.s32 %v574, %v576
        %v578 = vrot.slane %v571, %v577
        %v579 = vcombine.low %v528, %v544
        %v581 = vunpack.c.l.s4 1983009808
        %v582 = vunpack.c.0.s8 %v581
        %v583 = vlaneseq
        %v584 = vshrl.u32 %v583, 7
        %v585 = vsub.s32 %v582, %v584
        %v586 = vrot.slane %v579, %v585
        %v587 = vcombine.low %v578, %v586
        %v589 = vunpack.c.l.s4 1934713408
        %v590 = vunpack.c.0.s8 %v589
        %v591 = vlaneseq
        %v592 = vshrl.u32 %v591, 7
        %v593 = vsub.s32 %v590, %v592
        %v594 = vrot.slane %v587, %v593
        %v595 = vcombine.high %v594, 0
        %v598 = vpack.i.b16 %v594, %v569
        %v600 = vshrl.u32 %v569, 16
        %v601 = vshrl.u32 %v594, 16
        %v602 = vpack.i.b16 %v601, %v600
        %v606 = vpack.i.b16 %v595, %v570
        %v608 = vshrl.u32 %v570, 16
        %v609 = vshrl.u32 %v595, 16
        %v610 = vpack.i.b16 %v609, %v608
        %vm612 = vcmask 60416
        %613 = vst.msk [vmem:[%s299] sm:$0xf] %vm612, %v598
        %614 = vst.msk [vmem:[%s299 + $0x4] sm:$0xf] %vm612, %v602
        %615 = vst.msk [vmem:[%s299 + $0x8] sm:$0xf] %vm612, %v606
        %616 = vst.msk [vmem:[%s299 + $0xc] sm:$0xf] %vm612, %v610
        %v617 = vpack.c.bf16 %v434, %v434
        %619 = vrot.lane.b32.xlu0 %v617, 120
        %v620 = vpop.permute.xlu0 %619
        %621 = vrot.lane.b32.xlu0 %v617, 112
        %v622 = vpop.permute.xlu0 %621
        %623 = vrot.lane.b32.xlu0 %v617, 104
        %v624 = vpop.permute.xlu0 %623
        %v626 = vunpack.c.l.s4 1983009808
        %v627 = vunpack.c.0.s8 %v626
        %v628 = vlaneseq
        %v629 = vshrl.u32 %v628, 7
        %v630 = vsub.s32 %v627, %v629
        %v631 = vrot.slane %v617, %v630
        %v634 = vunpack.c.l.s4 1983009808
        %v635 = vunpack.c.0.s8 %v634
        %v636 = vlaneseq
        %v637 = vshrl.u32 %v636, 7
        %v638 = vsub.s32 %v635, %v637
        %v639 = vrot.slane %v622, %v638
        %v640 = vcombine.low %v631, %v639
        %v641 = vcombine.high %v631, %v639
        %v643 = vunpack.c.l.s4 1934713408
        %v644 = vunpack.c.0.s8 %v643
        %v645 = vlaneseq
        %v646 = vshrl.u32 %v645, 7
        %v647 = vsub.s32 %v644, %v646
        %v648 = vrot.slane %v640, %v647
        %v650 = vunpack.c.l.s4 1934713408
        %v651 = vunpack.c.0.s8 %v650
        %v652 = vlaneseq
        %v653 = vshrl.u32 %v652, 7
        %v654 = vsub.s32 %v651, %v653
        %v655 = vrot.slane %v641, %v654
        %v656 = vcombine.high %v648, 0
        %v657 = vcombine.high %v655, 0
        %v660 = vunpack.c.l.s4 1983009808
        %v661 = vunpack.c.0.s8 %v660
        %v662 = vlaneseq
        %v663 = vshrl.u32 %v662, 7
        %v664 = vsub.s32 %v661, %v663
        %v665 = vrot.slane %v620, %v664
        %v668 = vunpack.c.l.s4 1983009808
        %v669 = vunpack.c.0.s8 %v668
        %v670 = vlaneseq
        %v671 = vshrl.u32 %v670, 7
        %v672 = vsub.s32 %v669, %v671
        %v673 = vrot.slane %v624, %v672
        %v674 = vcombine.low %v665, %v673
        %v675 = vcombine.high %v665, %v673
        %v677 = vunpack.c.l.s4 1934713408
        %v678 = vunpack.c.0.s8 %v677
        %v679 = vlaneseq
        %v680 = vshrl.u32 %v679, 7
        %v681 = vsub.s32 %v678, %v680
        %v682 = vrot.slane %v674, %v681
        %v684 = vunpack.c.l.s4 1934713408
        %v685 = vunpack.c.0.s8 %v684
        %v686 = vlaneseq
        %v687 = vshrl.u32 %v686, 7
        %v688 = vsub.s32 %v685, %v687
        %v689 = vrot.slane %v675, %v688
        %v690 = vcombine.high %v682, 0
        %v691 = vcombine.high %v689, 0
        %v694 = vpack.i.b16 %v682, %v648
        %v696 = vshrl.u32 %v648, 16
        %v697 = vshrl.u32 %v682, 16
        %v698 = vpack.i.b16 %v697, %v696
        %v702 = vpack.i.b16 %v690, %v656
        %v704 = vshrl.u32 %v656, 16
        %v705 = vshrl.u32 %v690, 16
        %v706 = vpack.i.b16 %v705, %v704
        %v710 = vpack.i.b16 %v689, %v655
        %v712 = vshrl.u32 %v655, 16
        %v713 = vshrl.u32 %v689, 16
        %v714 = vpack.i.b16 %v713, %v712
        %v718 = vpack.i.b16 %v691, %v657
        %v720 = vshrl.u32 %v657, 16
        %v721 = vshrl.u32 %v691, 16
        %v722 = vpack.i.b16 %v721, %v720
        %v724 = vcombine.low %v694, %v710
        %v726 = vunpack.c.l.s4 1983009808
        %v727 = vunpack.c.0.s8 %v726
        %v728 = vlaneseq
        %v729 = vshrl.u32 %v728, 7
        %v730 = vsub.s32 %v727, %v729
        %v731 = vrot.slane %v724, %v730
        %v732 = vcombine.low %v702, %v718
        %v734 = vunpack.c.l.s4 1983009808
        %v735 = vunpack.c.0.s8 %v734
        %v736 = vlaneseq
        %v737 = vshrl.u32 %v736, 7
        %v738 = vsub.s32 %v735, %v737
        %v739 = vrot.slane %v732, %v738
        %v740 = vcombine.low %v731, %v739
        %v742 = vunpack.c.l.s4 1934713408
        %v743 = vunpack.c.0.s8 %v742
        %v744 = vlaneseq
        %v745 = vshrl.u32 %v744, 7
        %v746 = vsub.s32 %v743, %v745
        %v747 = vrot.slane %v740, %v746
        %v748 = vcombine.high %v747, 0
        %v749 = vcombine.low %v698, %v714
        %v751 = vunpack.c.l.s4 1983009808
        %v752 = vunpack.c.0.s8 %v751
        %v753 = vlaneseq
        %v754 = vshrl.u32 %v753, 7
        %v755 = vsub.s32 %v752, %v754
        %v756 = vrot.slane %v749, %v755
        %v757 = vcombine.low %v706, %v722
        %v759 = vunpack.c.l.s4 1983009808
        %v760 = vunpack.c.0.s8 %v759
        %v761 = vlaneseq
        %v762 = vshrl.u32 %v761, 7
        %v763 = vsub.s32 %v760, %v762
        %v764 = vrot.slane %v757, %v763
        %v765 = vcombine.low %v756, %v764
        %v767 = vunpack.c.l.s4 1934713408
        %v768 = vunpack.c.0.s8 %v767
        %v769 = vlaneseq
        %v770 = vshrl.u32 %v769, 7
        %v771 = vsub.s32 %v768, %v770
        %v772 = vrot.slane %v765, %v771
        %v773 = vcombine.high %v772, 0
        %v776 = vpack.i.b16 %v772, %v747
        %v778 = vshrl.u32 %v747, 16
        %v779 = vshrl.u32 %v772, 16
        %v780 = vpack.i.b16 %v779, %v778
        %v784 = vpack.i.b16 %v773, %v748
        %v786 = vshrl.u32 %v748, 16
        %v787 = vshrl.u32 %v773, 16
        %v788 = vpack.i.b16 %v787, %v786
        %790 = vst.msk [vmem:[%s306] sm:$0xf] %vm612, %v776
        %791 = vst.msk [vmem:[%s306 + $0x4] sm:$0xf] %vm612, %v780
        %792 = vst.msk [vmem:[%s306 + $0x8] sm:$0xf] %vm612, %v784
        %793 = vst.msk [vmem:[%s306 + $0xc] sm:$0xf] %vm612, %v788
        %s794 = sand.u32 %s146, 1
        %s795 = scalar_lea.sflag [#allocation4], %s794
        %s796 = sand.u32 %s146, 1
        %s797 = smul.addr %s796, 16
        %s798 = scalar_lea.vmem [#allocation8], %s797
        %s799 = sand.u32 %s172, 1
        %s800 = scalar_lea.sflag [#allocation10], %s799
        %s801 = sand.u32 %s172, 1
        %s802 = smul.addr %s801, 16
        %s803 = scalar_lea.vmem [#allocation9], %s802
        // Predicated region
        $region53: #{tpu_custom_call.1} parent=39 // pred_check
          %p804 = pneg %p156
        $region54: #{tpu_custom_call.1} parent=39 // pred_check_branch
          %806 = sbr.rel (%p804) target = $region56
        $region55: #{tpu_custom_call.1} parent=39 // pred_region
          %s808 = ssub.s32 256, 256
          %809 = vsyncadd %s795, %s808
          %s810 = smul.addr %s28, 4
          %s811 = smul.addr %s810, 64
          %s812 = scalar_lea.hbm %s5, %s811
          %s813 = sshll.u32 %s798, 4
          %s814 = int_to_ptr.vmem [resolvable:$true] %s813
          %819 = dma.vmem_to_hbm [thread:$0]  %s814, 256, %s812, %s795, 64, 64, 4
        $region56: #{tpu_custom_call.1} parent=39 // pred_fallthru
          _
        // Predicated region
        $region57: #{tpu_custom_call.1} parent=39 // pred_check
          %p820 = pneg %p182
        $region58: #{tpu_custom_call.1} parent=39 // pred_check_branch
          %822 = sbr.rel (%p820) target = $region60
        $region59: #{tpu_custom_call.1} parent=39 // pred_region
          %s824 = ssub.s32 256, 256
          %825 = vsyncadd %s800, %s824
          %s826 = smul.addr %s28, 4
          %s827 = smul.addr %s826, 64
          %s828 = scalar_lea.hbm %s6, %s827
          %s829 = sshll.u32 %s803, 4
          %s830 = int_to_ptr.vmem [resolvable:$true] %s829
          %835 = dma.vmem_to_hbm [thread:$0]  %s830, 256, %s828, %s800, 64, 64, 4
        $region60: #{tpu_custom_call.1} parent=39 // pred_fallthru
          _
      $region40: #{tpu_custom_call.1} parent=5 // pred_fallthru
        _
      %p836 = scmp.le.s32.totalorder 2, %s23
      // Predicated region
      $region61: #{tpu_custom_call.1} parent=5 // pred_check
        %p837 = pneg %p836
      $region62: #{tpu_custom_call.1} parent=5 // pred_check_branch
        %839 = sbr.rel (%p837) target = $region64
      $region63: #{tpu_custom_call.1} parent=5 // pred_region
        %s840 = ssub.s32 %s23, 2
        // Predicated region
        $region65: #{tpu_custom_call.1} parent=63 // pred_check
          %p841 = pneg %p162
        $region66: #{tpu_custom_call.1} parent=63 // pred_check_branch
          %843 = sbr.rel (%p841) target = $region68
        $region67: #{tpu_custom_call.1} parent=63 // pred_region
          %s844 = sand.u32 %s147, 1
          %s845 = scalar_lea.sflag [#allocation4], %s844
          %s846 = sand.u32 %s147, 1
          %s847 = smul.addr %s846, 16
          %s848 = scalar_lea.vmem [#allocation8], %s847
          %849 = dma.done %s845, 256
        $region68: #{tpu_custom_call.1} parent=63 // pred_fallthru
          _
        // Predicated region
        $region69: #{tpu_custom_call.1} parent=63 // pred_check
          %p850 = pneg %p188
        $region70: #{tpu_custom_call.1} parent=63 // pred_check_branch
          %852 = sbr.rel (%p850) target = $region72
        $region71: #{tpu_custom_call.1} parent=63 // pred_region
          %s853 = sand.u32 %s173, 1
          %s854 = scalar_lea.sflag [#allocation10], %s853
          %s855 = sand.u32 %s173, 1
          %s856 = smul.addr %s855, 16
          %s857 = scalar_lea.vmem [#allocation9], %s856
          %858 = dma.done %s854, 256
        $region72: #{tpu_custom_call.1} parent=63 // pred_fallthru
          _
      $region64: #{tpu_custom_call.1} parent=5 // pred_fallthru
        _
    $region6: #{tpu_custom_call.1} parent=1 // loop_footer
      %s27 = sadd.s32 1, %s23
    $region7: #{tpu_custom_call.1} parent=1 // loop_footer_branch
      %22 = sbr.rel target = $region3
    $region8: #{tpu_custom_call.1} parent=1 // loop_exit
      _
    %859 = vsyncpa [#allocation3], 1
    %s860 = scalar_lea.sflag [#allocation3], 1
    %861 = vsyncpa %s860, 1
    %862 = vsyncpa [#allocation6], 1
    %863 = vsyncpa [#allocation4], 1
    %s864 = scalar_lea.sflag [#allocation4], 1
    %865 = vsyncpa %s864, 1
    %866 = vsyncpa [#allocation10], 1
    %s867 = scalar_lea.sflag [#allocation10], 1
    %868 = vsyncpa %s867, 1

// kernel: tpu_custom_call.1
$region0: #{tpu_custom_call.1}
  #allocation0 [shape = 'u32[]', space=smem, size = 0x4, offset = 0x4, fixed_abs, tag = 'smem constant byte address 0x4 - core index']
  #allocation1 [shape = 'u32[144,128]{1,0:T(1,128)}', space=vmem, size = 0x12000, scoped, tag = 'internal scratch']
  %s0 = inlined_call_operand.hbm [shape: bf16[2,8,32], index: 0, kind: input, shape index: {}]
  %s1 = inlined_call_operand.hbm [shape: bf16[32,32], index: 1, kind: input, shape index: {}]
  %s2 = inlined_call_operand.hbm [shape: bf16[32,32], index: 2, kind: input, shape index: {}]
  %s3 = inlined_call_operand.vmem [shape: f32[1,32], index: 3, kind: input, shape index: {}]
  %s4 = inlined_call_operand.vmem [shape: f32[1,32], index: 4, kind: input, shape index: {}]
  %s5 = inlined_call_operand.hbm [shape: bf16[2,4,8,8], index: 5, kind: output, shape index: {0}]
  %s6 = inlined_call_operand.hbm [shape: bf16[2,4,8,8], index: 6, kind: output, shape index: {1}]
  %7 = xla_tuple %s5, %s6
  %s8 = sld [smem:[#allocation0]]
  $region73: #{tpu_custom_call.1} parent=0
    _
  %s10 = ssub.s32 1, %s8
  %s11 = scalar_select 0, %s10, %s8
  $region1: #{tpu_custom_call.1} parent=0
    #allocation2 [shape = 'u8[4096]{0}', space=vmem, size = 0x1000, scoped, tag = 'input window, operand 0']
    #allocation3 [shape = 's32[2]{0}', space=sflag, size = 0x8, scoped, tag = 'scoped memory for tpu_custom_call.1']
    #allocation4 [shape = 's32[2]{0}', space=sflag, size = 0x8, scoped, tag = 'scoped memory for tpu_custom_call.1']
    #allocation5 [shape = 'u8[8192]{0}', space=vmem, size = 0x2000, scoped, tag = 'input window, operand 1, single buffered']
    #allocation6 [shape = 's32[1]{0}', space=sflag, size = 0x4, scoped, tag = 'scoped memory for tpu_custom_call.1']
    #allocation7 [shape = 'u8[8192]{0}', space=vmem, size = 0x2000, scoped, tag = 'input window, operand 2, single buffered']
    #allocation8 [shape = 'u8[16384]{0}', space=vmem, size = 0x4000, scoped, tag = 'output window, operand 0']
    #allocation9 [shape = 'u8[16384]{0}', space=vmem, size = 0x4000, scoped, tag = 'output window, operand 1']
    #allocation10 [shape = 's32[2]{0}', space=sflag, size = 0x8, scoped, tag = 'scoped memory for tpu_custom_call.1']
    %12 = vsyncpa [#allocation3], 0
    %s13 = scalar_lea.sflag [#allocation3], 1
    %14 = vsyncpa %s13, 0
    %15 = vsyncpa [#allocation6], 0
    %16 = vsyncpa [#allocation4], 0
    %s17 = scalar_lea.sflag [#allocation4], 1
    %18 = vsyncpa %s17, 0
    %19 = vsyncpa [#allocation10], 0
    %s20 = scalar_lea.sflag [#allocation10], 1
    %21 = vsyncpa %s20, 0
    loop: start=0, step=1, limit=4
    $region2: #{tpu_custom_call.1} parent=1 // loop_pre_header
      _
    $region3: #{tpu_custom_call.1} parent=1 // loop_header
      %s23 = sphi 0, %s27
      %p24 = scmp.ge.s32.totalorder %s23, 4
      %s33 = sphi 0, %s35
      %s36 = sphi 0, %s33
      %s37 = sphi 0, %s36
      %s53 = sphi 0, %s37
      %s57 = sphi 0, %s57
      %s59 = sphi 0, %s57
      %s60 = sphi 0, %s59
      %s74 = sphi 0, %s60
      %s78 = sphi 0, %s78
      %s80 = sphi 0, %s78
      %s81 = sphi 0, %s80
      %s95 = sphi 0, %s81
      %s99 = sphi 0, %s99
      %s101 = sphi 0, %s99
      %s102 = sphi 0, %s101
      %s116 = sphi 0, %s102
      %s120 = sphi 0, %s120
      %s122 = sphi 0, %s120
      %s123 = sphi 0, %s122
      %s137 = sphi 0, %s123
      %s143 = sphi 0, %s145
      %s146 = sphi 0, %s143
      %s147 = sphi 0, %s146
      %s163 = sphi 0, %s147
      %s169 = sphi 0, %s171
      %s172 = sphi 0, %s169
      %s173 = sphi 0, %s172
      %s189 = sphi 0, %s173
    $region4: #{tpu_custom_call.1} parent=1 // loop_header_branch
      %26 = sbr.rel (%p24) target = $region8
    $region5: #{tpu_custom_call.1} parent=1 // loop_body
      %s28 = ssub.s32 %s23, 1
      %s29 = ssub.s32 %s23, 2
      %s30 = sadd.s32 %s23, 1
      %s31 = ssub.s32 %s23, %s30
      %p32 = scmp.eq.s32.totalorder %s31, 0
      %s34 = sadd.s32 %s33, 1
      %s35 = scalar_select %p32, %s33, %s34
      %p38 = pneg %p32
      %p39 = scmp.eq.s32.totalorder %s23, 1
      %p40 = por %p38, %p39
      %p41 = scmp.ne.s32.totalorder %s33, %s36
      %p42 = scmp.eq.s32.totalorder %s23, 0
      %p43 = por %p41, %p42
      %p44 = scmp.ne.s32.totalorder %s33, %s36
      %p45 = scmp.eq.s32.totalorder %s28, 1
      %p46 = por %p44, %p45
      %p47 = scmp.ne.s32.totalorder %s36, %s37
      %p48 = scmp.eq.s32.totalorder %s28, 0
      %p49 = por %p47, %p48
      %p50 = scmp.ne.s32.totalorder %s36, %s37
      %p51 = scmp.eq.s32.totalorder %s29, 1
      %p52 = por %p50, %p51
      %p54 = scmp.ne.s32.totalorder %s37, %s53
      %p55 = scmp.eq.s32.totalorder %s29, 0
      %p56 = por %p54, %p55
      %s58 = sadd.s32 %s57, 1
      %p61 = scmp.eq.s32.totalorder %s23, 1
      %p62 = scmp.ne.s32.totalorder %s57, %s59
      %p63 = scmp.eq.s32.totalorder %s23, 0
      %p64 = por %p62, %p63
      %p65 = scmp.ne.s32.totalorder %s57, %s59
      %p66 = scmp.eq.s32.totalorder %s28, 1
      %p67 = por %p65, %p66
      %p68 = scmp.ne.s32.totalorder %s59, %s60
      %p69 = scmp.eq.s32.totalorder %s28, 0
      %p70 = por %p68, %p69
      %p71 = scmp.ne.s32.totalorder %s59, %s60
      %p72 = scmp.eq.s32.totalorder %s29, 1
      %p73 = por %p71, %p72
      %p75 = scmp.ne.s32.totalorder %s60, %s74
      %p76 = scmp.eq.s32.totalorder %s29, 0
      %p77 = por %p75, %p76
      %s79 = sadd.s32 %s78, 1
      %p82 = scmp.eq.s32.totalorder %s23, 1
      %p83 = scmp.ne.s32.totalorder %s78, %s80
      %p84 = scmp.eq.s32.totalorder %s23, 0
      %p85 = por %p83, %p84
      %p86 = scmp.ne.s32.totalorder %s78, %s80
      %p87 = scmp.eq.s32.totalorder %s28, 1
      %p88 = por %p86, %p87
      %p89 = scmp.ne.s32.totalorder %s80, %s81
      %p90 = scmp.eq.s32.totalorder %s28, 0
      %p91 = por %p89, %p90
      %p92 = scmp.ne.s32.totalorder %s80, %s81
      %p93 = scmp.eq.s32.totalorder %s29, 1
      %p94 = por %p92, %p93
      %p96 = scmp.ne.s32.totalorder %s81, %s95
      %p97 = scmp.eq.s32.totalorder %s29, 0
      %p98 = por %p96, %p97
      %s100 = sadd.s32 %s99, 1
      %p103 = scmp.eq.s32.totalorder %s23, 1
      %p104 = scmp.ne.s32.totalorder %s99, %s101
      %p105 = scmp.eq.s32.totalorder %s23, 0
      %p106 = por %p104, %p105
      %p107 = scmp.ne.s32.totalorder %s99, %s101
      %p108 = scmp.eq.s32.totalorder %s28, 1
      %p109 = por %p107, %p108
      %p110 = scmp.ne.s32.totalorder %s101, %s102
      %p111 = scmp.eq.s32.totalorder %s28, 0
      %p112 = por %p110, %p111
      %p113 = scmp.ne.s32.totalorder %s101, %s102
      %p114 = scmp.eq.s32.totalorder %s29, 1
      %p115 = por %p113, %p114
      %p117 = scmp.ne.s32.totalorder %s102, %s116
      %p118 = scmp.eq.s32.totalorder %s29, 0
      %p119 = por %p117, %p118
      %s121 = sadd.s32 %s120, 1
      %p124 = scmp.eq.s32.totalorder %s23, 1
      %p125 = scmp.ne.s32.totalorder %s120, %s122
      %p126 = scmp.eq.s32.totalorder %s23, 0
      %p127 = por %p125, %p126
      %p128 = scmp.ne.s32.totalorder %s120, %s122
      %p129 = scmp.eq.s32.totalorder %s28, 1
      %p130 = por %p128, %p129
      %p131 = scmp.ne.s32.totalorder %s122, %s123
      %p132 = scmp.eq.s32.totalorder %s28, 0
      %p133 = por %p131, %p132
      %p134 = scmp.ne.s32.totalorder %s122, %s123
      %p135 = scmp.eq.s32.totalorder %s29, 1
      %p136 = por %p134, %p135
      %p138 = scmp.ne.s32.totalorder %s123, %s137
      %p139 = scmp.eq.s32.totalorder %s29, 0
      %p140 = por %p138, %p139
      %s141 = ssub.s32 %s23, %s30
      %p142 = scmp.eq.s32.totalorder %s141, 0
      %s144 = sadd.s32 %s143, 1
      %s145 = scalar_select %p142, %s143, %s144
      %p148 = pneg %p142
      %p149 = scmp.eq.s32.totalorder %s23, 1
      %p150 = por %p148, %p149
      %p151 = scmp.ne.s32.totalorder %s143, %s146
      %p152 = scmp.eq.s32.totalorder %s23, 0
      %p153 = por %p151, %p152
      %p154 = scmp.ne.s32.totalorder %s143, %s146
      %p155 = scmp.eq.s32.totalorder %s28, 1
      %p156 = por %p154, %p155
      %p157 = scmp.ne.s32.totalorder %s146, %s147
      %p158 = scmp.eq.s32.totalorder %s28, 0
      %p159 = por %p157, %p158
      %p160 = scmp.ne.s32.totalorder %s146, %s147
      %p161 = scmp.eq.s32.totalorder %s29, 1
      %p162 = por %p160, %p161
      %p164 = scmp.ne.s32.totalorder %s147, %s163
      %p165 = scmp.eq.s32.totalorder %s29, 0
      %p166 = por %p164, %p165
      %s167 = ssub.s32 %s23, %s30
      %p168 = scmp.eq.s32.totalorder %s167, 0
      %s170 = sadd.s32 %s169, 1
      %s171 = scalar_select %p168, %s169, %s170
      %p174 = pneg %p168
      %p175 = scmp.eq.s32.totalorder %s23, 1
      %p176 = por %p174, %p175
      %p177 = scmp.ne.s32.totalorder %s169, %s172
      %p178 = scmp.eq.s32.totalorder %s23, 0
      %p179 = por %p177, %p178
      %p180 = scmp.ne.s32.totalorder %s169, %s172
      %p181 = scmp.eq.s32.totalorder %s28, 1
      %p182 = por %p180, %p181
      %p183 = scmp.ne.s32.totalorder %s172, %s173
      %p184 = scmp.eq.s32.totalorder %s28, 0
      %p185 = por %p183, %p184
      %p186 = scmp.ne.s32.totalorder %s172, %s173
      %p187 = scmp.eq.s32.totalorder %s29, 1
      %p188 = por %p186, %p187
      %p190 = scmp.ne.s32.totalorder %s173, %s189
      %p191 = scmp.eq.s32.totalorder %s29, 0
      %p192 = por %p190, %p191
      %p193 = scmp.le.s32.totalorder 1, %s23
      %p194 = scmp.lt.s32.totalorder %s23, 3
      %p195 = pnand %p193, %p194
      %p196 = pneg %p195
      // Predicated region
      $region9: #{tpu_custom_call.1} parent=5 // pred_check
        _
      $region10: #{tpu_custom_call.1} parent=5 // pred_check_branch
        %198 = sbr.rel (%p195) target = $region12
      $region11: #{tpu_custom_call.1} parent=5 // pred_region
        %s199 = ssub.s32 %s23, 1
        // Predicated region
        $region13: #{tpu_custom_call.1} parent=11 // pred_check
          %p200 = pneg %p70
        $region14: #{tpu_custom_call.1} parent=11 // pred_check_branch
          %202 = sbr.rel (%p200) target = $region16
        $region15: #{tpu_custom_call.1} parent=11 // pred_region
          %s204 = ssub.s32 256, 256
          %205 = vsyncadd [#allocation6], %s204
          %s206 = sshll.u32 [#allocation5], 4
          %s207 = int_to_ptr.vmem [resolvable:$true] %s206
          %212 = dma.hbm_to_vmem [thread:$0]  %s1, 256, %s207, [#allocation6], 64, 64, 4
        $region16: #{tpu_custom_call.1} parent=11 // pred_fallthru
          _
        // Predicated region
        $region17: #{tpu_custom_call.1} parent=11 // pred_check
          %p213 = pneg %p91
        $region18: #{tpu_custom_call.1} parent=11 // pred_check_branch
          %215 = sbr.rel (%p213) target = $region20
        $region19: #{tpu_custom_call.1} parent=11 // pred_region
          %s217 = ssub.s32 256, 256
          %218 = vsyncadd [#allocation6], %s217
          %s219 = sshll.u32 [#allocation7], 4
          %s220 = int_to_ptr.vmem [resolvable:$true] %s219
          %225 = dma.hbm_to_vmem [thread:$0]  %s2, 256, %s220, [#allocation6], 64, 64, 4
        $region20: #{tpu_custom_call.1} parent=11 // pred_fallthru
          _
        // Predicated region
        $region21: #{tpu_custom_call.1} parent=11 // pred_check
          %p226 = pneg %p112
        $region22: #{tpu_custom_call.1} parent=11 // pred_check_branch
          %228 = sbr.rel (%p226) target = $region24
        $region23: #{tpu_custom_call.1} parent=11 // pred_region
          _
        $region24: #{tpu_custom_call.1} parent=11 // pred_fallthru
          _
        // Predicated region
        $region25: #{tpu_custom_call.1} parent=11 // pred_check
          %p229 = pneg %p133
        $region26: #{tpu_custom_call.1} parent=11 // pred_check_branch
          %231 = sbr.rel (%p229) target = $region28
        $region27: #{tpu_custom_call.1} parent=11 // pred_region
          _
        $region28: #{tpu_custom_call.1} parent=11 // pred_fallthru
          _
      $region12: #{tpu_custom_call.1} parent=5 // pred_fallthru
        _
      %p232 = scmp.lt.s32.totalorder %s23, 2
      // Predicated region
      $region29: #{tpu_custom_call.1} parent=5 // pred_check
        %p233 = pneg %p232
      $region30: #{tpu_custom_call.1} parent=5 // pred_check_branch
        %235 = sbr.rel (%p233) target = $region32
      $region31: #{tpu_custom_call.1} parent=5 // pred_region
        // Predicated region
        $region33: #{tpu_custom_call.1} parent=31 // pred_check
          %p236 = pneg %p43
        $region34: #{tpu_custom_call.1} parent=31 // pred_check_branch
          %238 = sbr.rel (%p236) target = $region36
        $region35: #{tpu_custom_call.1} parent=31 // pred_region
          %s239 = sand.u32 %s33, 1
          %s240 = scalar_lea.sflag [#allocation3], %s239
          %s241 = sand.u32 %s33, 1
          %s242 = smul.addr %s241, 4
          %s243 = scalar_lea.vmem [#allocation2], %s242
          %s245 = ssub.s32 64, 64
          %246 = vsyncadd %s240, %s245
          %s247 = smul.addr %s23, 64
          %s248 = scalar_lea.hbm %s0, %s247
          %s250 = sshll.u32 %s243, 4
          %s251 = int_to_ptr.vmem [resolvable:$true] %s250
          %253 = dma.hbm_to_vmem [thread:$0]  %s248, 64, %s251, %s240
        $region36: #{tpu_custom_call.1} parent=31 // pred_fallthru
          _
      $region32: #{tpu_custom_call.1} parent=5 // pred_fallthru
        _
      %p254 = scmp.le.s32.totalorder 1, %s23
      %p255 = scmp.lt.s32.totalorder %s23, 3
      %p256 = pnand %p254, %p255
      %p257 = pneg %p256
      // Predicated region
      $region37: #{tpu_custom_call.1} parent=5 // pred_check
        _
      $region38: #{tpu_custom_call.1} parent=5 // pred_check_branch
        %259 = sbr.rel (%p256) target = $region40
      $region39: #{tpu_custom_call.1} parent=5 // pred_region
        %s260 = ssub.s32 %s23, 1
        %s261 = sand.u32 %s36, 1
        %s262 = scalar_lea.sflag [#allocation3], %s261
        %s263 = sand.u32 %s36, 1
        %s264 = smul.addr %s263, 4
        %s265 = scalar_lea.vmem [#allocation2], %s264
        // Predicated region
        $region41: #{tpu_custom_call.1} parent=39 // pred_check
          %p266 = pneg %p49
        $region42: #{tpu_custom_call.1} parent=39 // pred_check_branch
          %268 = sbr.rel (%p266) target = $region44
        $region43: #{tpu_custom_call.1} parent=39 // pred_region
          %269 = dma.done %s262, 64
        $region44: #{tpu_custom_call.1} parent=39 // pred_fallthru
          _
        // Predicated region
        $region45: #{tpu_custom_call.1} parent=39 // pred_check
          %p270 = pneg %p70
        $region46: #{tpu_custom_call.1} parent=39 // pred_check_branch
          %272 = sbr.rel (%p270) target = $region48
        $region47: #{tpu_custom_call.1} parent=39 // pred_region
          %273 = dma.done [#allocation6], 256
        $region48: #{tpu_custom_call.1} parent=39 // pred_fallthru
          _
        // Predicated region
        $region49: #{tpu_custom_call.1} parent=39 // pred_check
          %p274 = pneg %p91
        $region50: #{tpu_custom_call.1} parent=39 // pred_check_branch
          %276 = sbr.rel (%p274) target = $region52
        $region51: #{tpu_custom_call.1} parent=39 // pred_region
          %277 = dma.done [#allocation6], 256
        $region52: #{tpu_custom_call.1} parent=39 // pred_fallthru
          _
        %s278 = sand.u32 %s36, 1
        %s279 = scalar_lea.sflag [#allocation3], %s278
        %s280 = sand.u32 %s36, 1
        %s281 = smul.addr %s280, 4
        %s282 = scalar_lea.vmem [#allocation2], %s281
        %p283 = pneg %p49
        %p284 = pneg %p46
        %p285 = pneg %p70
        %p286 = pneg %p67
        %p287 = pneg %p91
        %p288 = pneg %p88
        %p289 = pneg %p112
        %p290 = pneg %p109
        %p291 = pneg %p133
        %p292 = pneg %p130
        %p293 = pneg %p159
        %p294 = pneg %p156
        %s295 = sand.u32 %s146, 1
        %s296 = scalar_lea.sflag [#allocation4], %s295
        %s297 = sand.u32 %s146, 1
        %s298 = smul.addr %s297, 16
        %s299 = scalar_lea.vmem [#allocation8], %s298
        %p300 = pneg %p185
        %p301 = pneg %p182
        %s302 = sand.u32 %s172, 1
        %s303 = scalar_lea.sflag [#allocation10], %s302
        %s304 = sand.u32 %s172, 1
        %s305 = smul.addr %s304, 16
        %s306 = scalar_lea.vmem [#allocation9], %s305
        %v308 = vld [vmem:[%s265] sm:$0xf]
        %v309 = vld [vmem:[#allocation5] sm:$0xf]
        %v310 = vld [vmem:[#allocation5 + $0x4] sm:$0xf]
        %v311 = vld [vmem:[#allocation5 + $0x8] sm:$0xf]
        %v312 = vld [vmem:[#allocation5 + $0xc] sm:$0xf]
        %v313 = vld [vmem:[%s3] sm:$0x1]
        %v315 = vlaneseq
        %v316 = vshrl.u32 %v315, 7
        %v317 = vsub.s32 0, %v316
        %v318 = vrot.slane %v313, %v317
        %v324 = vunpack.c.l.b16 %v309
        %v325 = vunpack.c.l.b16 %v310
        %v326 = vunpack.c.l.b16 %v311
        %v327 = vunpack.c.l.b16 %v312
        %v328 = vpack.c.b16 %v325, %v324
        %v329 = vpack.c.b16 %v327, %v326
        %vm332 = vcmask 261120
        %v334 = vsel %vm332, %v308, 0
        %336 = vmatprep.subr.bf16.mxu0 0
        %337 = vmatpush1.bf16.msra.mxu0 %v328
        %338 = vmatprep.subr.bf16.mxu0 0
        %339 = vmatpush1.bf16.msra.mxu0 %v329
        %340 = vmatprep.subr.bf16.mxu0 0
        %341 = vmatpush1.bf16.msra.mxu0 0
        %342 = vmatprep.subr.bf16.mxu0 0
        %343 = vmatpush1.bf16.msra.mxu0 0
        %344 = vmatprep.subr.bf16.mxu0 0
        %345 = vmatpush1.bf16.msra.mxu0 0
        %346 = vmatprep.subr.bf16.mxu0 0
        %347 = vmatpush1.bf16.msra.mxu0 0
        %348 = vmatprep.subr.bf16.mxu0 0
        %349 = vmatpush1.bf16.msra.mxu0 0
        %350 = vmatprep.subr.bf16.mxu0 0
        %351 = vmatpush1.bf16.msra.mxu0 0
        %352 = vmatprep.subr.bf16.mxu0 0
        %353 = vmatpush1.bf16.msra.mxu0 0
        %354 = vmatprep.subr.bf16.mxu0 0
        %355 = vmatpush1.bf16.msra.mxu0 0
        %356 = vmatprep.subr.bf16.mxu0 0
        %357 = vmatpush1.bf16.msra.mxu0 0
        %358 = vmatprep.subr.bf16.mxu0 0
        %359 = vmatpush1.bf16.msra.mxu0 0
        %360 = vmatprep.subr.bf16.mxu0 0
        %361 = vmatpush1.bf16.msra.mxu0 0
        %362 = vmatprep.subr.bf16.mxu0 0
        %363 = vmatpush1.bf16.msra.mxu0 0
        %364 = vmatprep.subr.bf16.mxu0 0
        %365 = vmatpush1.bf16.msra.mxu0 0
        %366 = vmatprep.subr.bf16.mxu0 0
        %367 = vmatpush1.bf16.msra.mxu0 0
        %368 = vmatprep.mubr.bf16.mxu0 0
        %369 = vmatmul.mubr.bf16.gmra.mrb[0].mxu0 %v334
        %v370 = vpop.f32.mrb[0].mxu0
        %v371 = vadd.f32 %v318, %v370
        %v372 = vpop.f32.mrb[0].mxu0
        %v373 = vpop.f32.mrb[0].mxu0
        %v374 = vpop.f32.mrb[0].mxu0
        %375 = vdwg.mxu0
        %v376 = vld [vmem:[#allocation7] sm:$0xf]
        %v377 = vld [vmem:[#allocation7 + $0x4] sm:$0xf]
        %v378 = vld [vmem:[#allocation7 + $0x8] sm:$0xf]
        %v379 = vld [vmem:[#allocation7 + $0xc] sm:$0xf]
        %v380 = vld [vmem:[%s4] sm:$0x1]
        %v382 = vlaneseq
        %v383 = vshrl.u32 %v382, 7
        %v384 = vsub.s32 0, %v383
        %v385 = vrot.slane %v380, %v384
        %v391 = vunpack.c.l.b16 %v376
        %v392 = vunpack.c.l.b16 %v377
        %v393 = vunpack.c.l.b16 %v378
        %v394 = vunpack.c.l.b16 %v379
        %v395 = vpack.c.b16 %v392, %v391
        %v396 = vpack.c.b16 %v394, %v393
        %399 = vmatprep.subr.bf16.mxu0 0
        %400 = vmatpush1.bf16.msra.mxu0 %v395
        %401 = vmatprep.subr.bf16.mxu0 0
        %402 = vmatpush1.bf16.msra.mxu0 %v396
        %403 = vmatprep.subr.bf16.mxu0 0
        %404 = vmatpush1.bf16.msra.mxu0 0
        %405 = vmatprep.subr.bf16.mxu0 0
        %406 = vmatpush1.bf16.msra.mxu0 0
        %407 = vmatprep.subr.bf16.mxu0 0
        %408 = vmatpush1.bf16.msra.mxu0 0
        %409 = vmatprep.subr.bf16.mxu0 0
        %410 = vmatpush1.bf16.msra.mxu0 0
        %411 = vmatprep.subr.bf16.mxu0 0
        %412 = vmatpush1.bf16.msra.mxu0 0
        %413 = vmatprep.subr.bf16.mxu0 0
        %414 = vmatpush1.bf16.msra.mxu0 0
        %415 = vmatprep.subr.bf16.mxu0 0
        %416 = vmatpush1.bf16.msra.mxu0 0
        %417 = vmatprep.subr.bf16.mxu0 0
        %418 = vmatpush1.bf16.msra.mxu0 0
        %419 = vmatprep.subr.bf16.mxu0 0
        %420 = vmatpush1.bf16.msra.mxu0 0
        %421 = vmatprep.subr.bf16.mxu0 0
        %422 = vmatpush1.bf16.msra.mxu0 0
        %423 = vmatprep.subr.bf16.mxu0 0
        %424 = vmatpush1.bf16.msra.mxu0 0
        %425 = vmatprep.subr.bf16.mxu0 0
        %426 = vmatpush1.bf16.msra.mxu0 0
        %427 = vmatprep.subr.bf16.mxu0 0
        %428 = vmatpush1.bf16.msra.mxu0 0
        %429 = vmatprep.subr.bf16.mxu0 0
        %430 = vmatpush1.bf16.msra.mxu0 0
        %431 = vmatprep.mubr.bf16.mxu0 0
        %432 = vmatmul.mubr.bf16.gmra.mrb[0].mxu0 %v334
        %v433 = vpop.f32.mrb[0].mxu0
        %v434 = vadd.f32 %v385, %v433
        %v435 = vpop.f32.mrb[0].mxu0
        %v436 = vpop.f32.mrb[0].mxu0
        %v437 = vpop.f32.mrb[0].mxu0
        %438 = vdwg.mxu0
        %v439 = vpack.c.bf16 %v371, %v371
        %441 = vrot.lane.b32.xlu0 %v439, 120
        %v442 = vpop.permute.xlu0 %441
        %443 = vrot.lane.b32.xlu0 %v439, 112
        %v444 = vpop.permute.xlu0 %443
        %445 = vrot.lane.b32.xlu0 %v439, 104
        %v446 = vpop.permute.xlu0 %445
        %v448 = vunpack.c.l.s4 1983009808
        %v449 = vunpack.c.0.s8 %v448
        %v450 = vlaneseq
        %v451 = vshrl.u32 %v450, 7
        %v452 = vsub.s32 %v449, %v451
        %v453 = vrot.slane %v439, %v452
        %v456 = vunpack.c.l.s4 1983009808
        %v457 = vunpack.c.0.s8 %v456
        %v458 = vlaneseq
        %v459 = vshrl.u32 %v458, 7
        %v460 = vsub.s32 %v457, %v459
        %v461 = vrot.slane %v444, %v460
        %v462 = vcombine.low %v453, %v461
        %v463 = vcombine.high %v453, %v461
        %v465 = vunpack.c.l.s4 1934713408
        %v466 = vunpack.c.0.s8 %v465
        %v467 = vlaneseq
        %v468 = vshrl.u32 %v467, 7
        %v469 = vsub.s32 %v466, %v468
        %v470 = vrot.slane %v462, %v469
        %v472 = vunpack.c.l.s4 1934713408
        %v473 = vunpack.c.0.s8 %v472
        %v474 = vlaneseq
        %v475 = vshrl.u32 %v474, 7
        %v476 = vsub.s32 %v473, %v475
        %v477 = vrot.slane %v463, %v476
        %v478 = vcombine.high %v470, 0
        %v479 = vcombine.high %v477, 0
        %v482 = vunpack.c.l.s4 1983009808
        %v483 = vunpack.c.0.s8 %v482
        %v484 = vlaneseq
        %v485 = vshrl.u32 %v484, 7
        %v486 = vsub.s32 %v483, %v485
        %v487 = vrot.slane %v442, %v486
        %v490 = vunpack.c.l.s4 1983009808
        %v491 = vunpack.c.0.s8 %v490
        %v492 = vlaneseq
        %v493 = vshrl.u32 %v492, 7
        %v494 = vsub.s32 %v491, %v493
        %v495 = vrot.slane %v446, %v494
        %v496 = vcombine.low %v487, %v495
        %v497 = vcombine.high %v487, %v495
        %v499 = vunpack.c.l.s4 1934713408
        %v500 = vunpack.c.0.s8 %v499
        %v501 = vlaneseq
        %v502 = vshrl.u32 %v501, 7
        %v503 = vsub.s32 %v500, %v502
        %v504 = vrot.slane %v496, %v503
        %v506 = vunpack.c.l.s4 1934713408
        %v507 = vunpack.c.0.s8 %v506
        %v508 = vlaneseq
        %v509 = vshrl.u32 %v508, 7
        %v510 = vsub.s32 %v507, %v509
        %v511 = vrot.slane %v497, %v510
        %v512 = vcombine.high %v504, 0
        %v513 = vcombine.high %v511, 0
        %v516 = vpack.i.b16 %v504, %v470
        %v518 = vshrl.u32 %v470, 16
        %v519 = vshrl.u32 %v504, 16
        %v520 = vpack.i.b16 %v519, %v518
        %v524 = vpack.i.b16 %v512, %v478
        %v526 = vshrl.u32 %v478, 16
        %v527 = vshrl.u32 %v512, 16
        %v528 = vpack.i.b16 %v527, %v526
        %v532 = vpack.i.b16 %v511, %v477
        %v534 = vshrl.u32 %v477, 16
        %v535 = vshrl.u32 %v511, 16
        %v536 = vpack.i.b16 %v535, %v534
        %v540 = vpack.i.b16 %v513, %v479
        %v542 = vshrl.u32 %v479, 16
        %v543 = vshrl.u32 %v513, 16
        %v544 = vpack.i.b16 %v543, %v542
        %v546 = vcombine.low %v516, %v532
        %v548 = vunpack.c.l.s4 1983009808
        %v549 = vunpack.c.0.s8 %v548
        %v550 = vlaneseq
        %v551 = vshrl.u32 %v550, 7
        %v552 = vsub.s32 %v549, %v551
        %v553 = vrot.slane %v546, %v552
        %v554 = vcombine.low %v524, %v540
        %v556 = vunpack.c.l.s4 1983009808
        %v557 = vunpack.c.0.s8 %v556
        %v558 = vlaneseq
        %v559 = vshrl.u32 %v558, 7
        %v560 = vsub.s32 %v557, %v559
        %v561 = vrot.slane %v554, %v560
        %v562 = vcombine.low %v553, %v561
        %v564 = vunpack.c.l.s4 1934713408
        %v565 = vunpack.c.0.s8 %v564
        %v566 = vlaneseq
        %v567 = vshrl.u32 %v566, 7
        %v568 = vsub.s32 %v565, %v567
        %v569 = vrot.slane %v562, %v568
        %v570 = vcombine.high %v569, 0
        %v571 = vcombine.low %v520, %v536
        %v573 = vunpack.c.l.s4 1983009808
        %v574 = vunpack.c.0.s8 %v573
        %v575 = vlaneseq
        %v576 = vshrl.u32 %v575, 7
        %v577 = vsub.s32 %v574, %v576
        %v578 = vrot.slane %v571, %v577
        %v579 = vcombine.low %v528, %v544
        %v581 = vunpack.c.l.s4 1983009808
        %v582 = vunpack.c.0.s8 %v581
        %v583 = vlaneseq
        %v584 = vshrl.u32 %v583, 7
        %v585 = vsub.s32 %v582, %v584
        %v586 = vrot.slane %v579, %v585
        %v587 = vcombine.low %v578, %v586
        %v589 = vunpack.c.l.s4 1934713408
        %v590 = vunpack.c.0.s8 %v589
        %v591 = vlaneseq
        %v592 = vshrl.u32 %v591, 7
        %v593 = vsub.s32 %v590, %v592
        %v594 = vrot.slane %v587, %v593
        %v595 = vcombine.high %v594, 0
        %v598 = vpack.i.b16 %v594, %v569
        %v600 = vshrl.u32 %v569, 16
        %v601 = vshrl.u32 %v594, 16
        %v602 = vpack.i.b16 %v601, %v600
        %v606 = vpack.i.b16 %v595, %v570
        %v608 = vshrl.u32 %v570, 16
        %v609 = vshrl.u32 %v595, 16
        %v610 = vpack.i.b16 %v609, %v608
        %vm612 = vcmask 60416
        %613 = vst.msk [vmem:[%s299] sm:$0xf] %vm612, %v598
        %614 = vst.msk [vmem:[%s299 + $0x4] sm:$0xf] %vm612, %v602
        %615 = vst.msk [vmem:[%s299 + $0x8] sm:$0xf] %vm612, %v606
        %616 = vst.msk [vmem:[%s299 + $0xc] sm:$0xf] %vm612, %v610
        %v617 = vpack.c.bf16 %v434, %v434
        %619 = vrot.lane.b32.xlu0 %v617, 120
        %v620 = vpop.permute.xlu0 %619
        %621 = vrot.lane.b32.xlu0 %v617, 112
        %v622 = vpop.permute.xlu0 %621
        %623 = vrot.lane.b32.xlu0 %v617, 104
        %v624 = vpop.permute.xlu0 %623
        %v626 = vunpack.c.l.s4 1983009808
        %v627 = vunpack.c.0.s8 %v626
        %v628 = vlaneseq
        %v629 = vshrl.u32 %v628, 7
        %v630 = vsub.s32 %v627, %v629
        %v631 = vrot.slane %v617, %v630
        %v634 = vunpack.c.l.s4 1983009808
        %v635 = vunpack.c.0.s8 %v634
        %v636 = vlaneseq
        %v637 = vshrl.u32 %v636, 7
        %v638 = vsub.s32 %v635, %v637
        %v639 = vrot.slane %v622, %v638
        %v640 = vcombine.low %v631, %v639
        %v641 = vcombine.high %v631, %v639
        %v643 = vunpack.c.l.s4 1934713408
        %v644 = vunpack.c.0.s8 %v643
        %v645 = vlaneseq
        %v646 = vshrl.u32 %v645, 7
        %v647 = vsub.s32 %v644, %v646
        %v648 = vrot.slane %v640, %v647
        %v650 = vunpack.c.l.s4 1934713408
        %v651 = vunpack.c.0.s8 %v650
        %v652 = vlaneseq
        %v653 = vshrl.u32 %v652, 7
        %v654 = vsub.s32 %v651, %v653
        %v655 = vrot.slane %v641, %v654
        %v656 = vcombine.high %v648, 0
        %v657 = vcombine.high %v655, 0
        %v660 = vunpack.c.l.s4 1983009808
        %v661 = vunpack.c.0.s8 %v660
        %v662 = vlaneseq
        %v663 = vshrl.u32 %v662, 7
        %v664 = vsub.s32 %v661, %v663
        %v665 = vrot.slane %v620, %v664
        %v668 = vunpack.c.l.s4 1983009808
        %v669 = vunpack.c.0.s8 %v668
        %v670 = vlaneseq
        %v671 = vshrl.u32 %v670, 7
        %v672 = vsub.s32 %v669, %v671
        %v673 = vrot.slane %v624, %v672
        %v674 = vcombine.low %v665, %v673
        %v675 = vcombine.high %v665, %v673
        %v677 = vunpack.c.l.s4 1934713408
        %v678 = vunpack.c.0.s8 %v677
        %v679 = vlaneseq
        %v680 = vshrl.u32 %v679, 7
        %v681 = vsub.s32 %v678, %v680
        %v682 = vrot.slane %v674, %v681
        %v684 = vunpack.c.l.s4 1934713408
        %v685 = vunpack.c.0.s8 %v684
        %v686 = vlaneseq
        %v687 = vshrl.u32 %v686, 7
        %v688 = vsub.s32 %v685, %v687
        %v689 = vrot.slane %v675, %v688
        %v690 = vcombine.high %v682, 0
        %v691 = vcombine.high %v689, 0
        %v694 = vpack.i.b16 %v682, %v648
        %v696 = vshrl.u32 %v648, 16
        %v697 = vshrl.u32 %v682, 16
        %v698 = vpack.i.b16 %v697, %v696
        %v702 = vpack.i.b16 %v690, %v656
        %v704 = vshrl.u32 %v656, 16
        %v705 = vshrl.u32 %v690, 16
        %v706 = vpack.i.b16 %v705, %v704
        %v710 = vpack.i.b16 %v689, %v655
        %v712 = vshrl.u32 %v655, 16
        %v713 = vshrl.u32 %v689, 16
        %v714 = vpack.i.b16 %v713, %v712
        %v718 = vpack.i.b16 %v691, %v657
        %v720 = vshrl.u32 %v657, 16
        %v721 = vshrl.u32 %v691, 16
        %v722 = vpack.i.b16 %v721, %v720
        %v724 = vcombine.low %v694, %v710
        %v726 = vunpack.c.l.s4 1983009808
        %v727 = vunpack.c.0.s8 %v726
        %v728 = vlaneseq
        %v729 = vshrl.u32 %v728, 7
        %v730 = vsub.s32 %v727, %v729
        %v731 = vrot.slane %v724, %v730
        %v732 = vcombine.low %v702, %v718
        %v734 = vunpack.c.l.s4 1983009808
        %v735 = vunpack.c.0.s8 %v734
        %v736 = vlaneseq
        %v737 = vshrl.u32 %v736, 7
        %v738 = vsub.s32 %v735, %v737
        %v739 = vrot.slane %v732, %v738
        %v740 = vcombine.low %v731, %v739
        %v742 = vunpack.c.l.s4 1934713408
        %v743 = vunpack.c.0.s8 %v742
        %v744 = vlaneseq
        %v745 = vshrl.u32 %v744, 7
        %v746 = vsub.s32 %v743, %v745
        %v747 = vrot.slane %v740, %v746
        %v748 = vcombine.high %v747, 0
        %v749 = vcombine.low %v698, %v714
        %v751 = vunpack.c.l.s4 1983009808
        %v752 = vunpack.c.0.s8 %v751
        %v753 = vlaneseq
        %v754 = vshrl.u32 %v753, 7
        %v755 = vsub.s32 %v752, %v754
        %v756 = vrot.slane %v749, %v755
        %v757 = vcombine.low %v706, %v722
        %v759 = vunpack.c.l.s4 1983009808
        %v760 = vunpack.c.0.s8 %v759
        %v761 = vlaneseq
        %v762 = vshrl.u32 %v761, 7
        %v763 = vsub.s32 %v760, %v762
        %v764 = vrot.slane %v757, %v763
        %v765 = vcombine.low %v756, %v764
        %v767 = vunpack.c.l.s4 1934713408
        %v768 = vunpack.c.0.s8 %v767
        %v769 = vlaneseq
        %v770 = vshrl.u32 %v769, 7
        %v771 = vsub.s32 %v768, %v770
        %v772 = vrot.slane %v765, %v771
        %v773 = vcombine.high %v772, 0
        %v776 = vpack.i.b16 %v772, %v747
        %v778 = vshrl.u32 %v747, 16
        %v779 = vshrl.u32 %v772, 16
        %v780 = vpack.i.b16 %v779, %v778
        %v784 = vpack.i.b16 %v773, %v748
        %v786 = vshrl.u32 %v748, 16
        %v787 = vshrl.u32 %v773, 16
        %v788 = vpack.i.b16 %v787, %v786
        %790 = vst.msk [vmem:[%s306] sm:$0xf] %vm612, %v776
        %791 = vst.msk [vmem:[%s306 + $0x4] sm:$0xf] %vm612, %v780
        %792 = vst.msk [vmem:[%s306 + $0x8] sm:$0xf] %vm612, %v784
        %793 = vst.msk [vmem:[%s306 + $0xc] sm:$0xf] %vm612, %v788
        %s794 = sand.u32 %s146, 1
        %s795 = scalar_lea.sflag [#allocation4], %s794
        %s796 = sand.u32 %s146, 1
        %s797 = smul.addr %s796, 16
        %s798 = scalar_lea.vmem [#allocation8], %s797
        %s799 = sand.u32 %s172, 1
        %s800 = scalar_lea.sflag [#allocation10], %s799
        %s801 = sand.u32 %s172, 1
        %s802 = smul.addr %s801, 16
        %s803 = scalar_lea.vmem [#allocation9], %s802
        // Predicated region
        $region53: #{tpu_custom_call.1} parent=39 // pred_check
          %p804 = pneg %p156
        $region54: #{tpu_custom_call.1} parent=39 // pred_check_branch
          %806 = sbr.rel (%p804) target = $region56
        $region55: #{tpu_custom_call.1} parent=39 // pred_region
          %s808 = ssub.s32 256, 256
          %809 = vsyncadd %s795, %s808
          %s810 = smul.addr %s28, 4
          %s811 = smul.addr %s810, 64
          %s812 = scalar_lea.hbm %s5, %s811
          %s813 = sshll.u32 %s798, 4
          %s814 = int_to_ptr.vmem [resolvable:$true] %s813
          %819 = dma.vmem_to_hbm [thread:$0]  %s814, 256, %s812, %s795, 64, 64, 4
        $region56: #{tpu_custom_call.1} parent=39 // pred_fallthru
          _
        // Predicated region
        $region57: #{tpu_custom_call.1} parent=39 // pred_check
          %p820 = pneg %p182
        $region58: #{tpu_custom_call.1} parent=39 // pred_check_branch
          %822 = sbr.rel (%p820) target = $region60
        $region59: #{tpu_custom_call.1} parent=39 // pred_region
          %s824 = ssub.s32 256, 256
          %825 = vsyncadd %s800, %s824
          %s826 = smul.addr %s28, 4
          %s827 = smul.addr %s826, 64
          %s828 = scalar_lea.hbm %s6, %s827
          %s829 = sshll.u32 %s803, 4
          %s830 = int_to_ptr.vmem [resolvable:$true] %s829
          %835 = dma.vmem_to_hbm [thread:$0]  %s830, 256, %s828, %s800, 64, 64, 4
        $region60: #{tpu_custom_call.1} parent=39 // pred_fallthru
          _
      $region40: #{tpu_custom_call.1} parent=5 // pred_fallthru
        _
      %p836 = scmp.le.s32.totalorder 2, %s23
      // Predicated region
      $region61: #{tpu_custom_call.1} parent=5 // pred_check
        %p837 = pneg %p836
      $region62: #{tpu_custom_call.1} parent=5 // pred_check_branch
        %839 = sbr.rel (%p837) target = $region64
      $region63: #{tpu_custom_call.1} parent=5 // pred_region
        %s840 = ssub.s32 %s23, 2
        // Predicated region
        $region65: #{tpu_custom_call.1} parent=63 // pred_check
          %p841 = pneg %p162
        $region66: #{tpu_custom_call.1} parent=63 // pred_check_branch
          %843 = sbr.rel (%p841) target = $region68
        $region67: #{tpu_custom_call.1} parent=63 // pred_region
          %s844 = sand.u32 %s147, 1
          %s845 = scalar_lea.sflag [#allocation4], %s844
          %s846 = sand.u32 %s147, 1
          %s847 = smul.addr %s846, 16
          %s848 = scalar_lea.vmem [#allocation8], %s847
          %849 = dma.done %s845, 256
        $region68: #{tpu_custom_call.1} parent=63 // pred_fallthru
          _
        // Predicated region
        $region69: #{tpu_custom_call.1} parent=63 // pred_check
          %p850 = pneg %p188
        $region70: #{tpu_custom_call.1} parent=63 // pred_check_branch
          %852 = sbr.rel (%p850) target = $region72
        $region71: #{tpu_custom_call.1} parent=63 // pred_region
          %s853 = sand.u32 %s173, 1
          %s854 = scalar_lea.sflag [#allocation10], %s853
          %s855 = sand.u32 %s173, 1
          %s856 = smul.addr %s855, 16
          %s857 = scalar_lea.vmem [#allocation9], %s856
          %858 = dma.done %s854, 256
        $region72: #{tpu_custom_call.1} parent=63 // pred_fallthru
          _
      $region64: #{tpu_custom_call.1} parent=5 // pred_fallthru
        _
    $region6: #{tpu_custom_call.1} parent=1 // loop_footer
      %s27 = sadd.s32 1, %s23
    $region7: #{tpu_custom_call.1} parent=1 // loop_footer_branch
      %22 = sbr.rel target = $region3
    $region8: #{tpu_custom_call.1} parent=1 // loop_exit
      _
    %859 = vsyncpa [#allocation3], 1
    %s860 = scalar_lea.sflag [#allocation3], 1
    %861 = vsyncpa %s860, 1
    %862 = vsyncpa [#allocation6], 1
    %863 = vsyncpa [#allocation4], 1
    %s864 = scalar_lea.sflag [#allocation4], 1
    %865 = vsyncpa %s864, 1
    %866 = vsyncpa [#allocation10], 1
    %s867 = scalar_lea.sflag [#allocation10], 1
    %868 = vsyncpa %s867, 1

</llo_original>
